<compile_context>
chip_gen: v6e
topology: v6e:2x2x1
jax: 0.10.0
libtpu: 0.0.40
codegen_flags: <defaults>
</compile_context>

<pallas_src>
import functools

import jax
import jax.numpy as jnp
from jax import lax
from jax.experimental import pallas as pl
from jax.experimental.pallas import tpu as pltpu


# ----------------------------- padding helpers -------------------------------

_SUBLANE = 8
_LANE = 128


def _round_up(n, m=_LANE):
    return max(m, ((n + m - 1) // m) * m)


def _pad_to(a, rows, cols):
    return jnp.pad(a, ((0, rows - a.shape[0]), (0, cols - a.shape[1])))


# ----------------------------- fused Pallas kernel ---------------------------

def make_fused_kernel(num_layers, num_dense, seq_len, batch_p, hp):
    """Build the fused kernel body.

    Ref layout (inputs, then output):
      x2d                      (T*Bp, Din)  time-major, flattened, batch padded
      wih0, whh0, b0           layer 0      (Din,HP), (HP,HP), (1,HP)
      [wstack_l, b_l] * (L-1)  layers >= 1  (2*HP,HP), (1,HP)  (stacked [W_ih;W_hh])
      [w_i, b_i] * num_dense   MLP head     lane-dense padded
      out                      (Bp, OUT_PAD)
    """

    def kernel(*refs):
        it = iter(refs)
        x_ref = next(it)
        wih0_ref, whh0_ref, b0_ref = next(it), next(it), next(it)
        upper = [(next(it), next(it)) for _ in range(num_layers - 1)]
        dense = [(next(it), next(it)) for _ in range(num_dense)]
        out_ref = next(it)

        # ---- hoisted loads / broadcasts (once, outside the time loop) ------
        whh0 = whh0_ref[...]                                        # (HP, HP)
        upper_w = [w_ref[...] for (w_ref, _) in upper]              # (2*HP, HP)
        upper_b = [jnp.broadcast_to(b_ref[...], (batch_p, hp))
                   for (_, b_ref) in upper]                         # (Bp, HP)

        # ---- layer-0 input projection, off the serial chain ----------------
        # One MXU call over all timesteps; bias folded in here.
        xproj = (jnp.dot(x_ref[...], wih0_ref[...],
                         preferred_element_type=jnp.float32)
                 + b0_ref[...])                                     # (T*Bp, HP)

        # ---- serial recurrence (fully unrolled; T static & small) ----------
        hs = [jnp.zeros((batch_p, hp), jnp.float32) for _ in range(num_layers)]
        for t in range(seq_len):
            xt = xproj[t * batch_p:(t + 1) * batch_p, :]            # static slice
            h = jnp.tanh(xt + jnp.dot(hs[0], whh0,
                                      preferred_element_type=jnp.float32))
            hs[0] = h
            for li in range(num_layers - 1):
                cat = jnp.concatenate([h, hs[li + 1]], axis=-1)     # (Bp, 2*HP)
                h = jnp.tanh(jnp.dot(cat, upper_w[li],
                                     preferred_element_type=jnp.float32)
                             + upper_b[li])
                hs[li + 1] = h

        # ---- MLP head on the last hidden state only -------------------------
        h = jnp.maximum(hs[-1], 0.0)                                # ReLU on RNN output
        for i, (w_ref, b_ref) in enumerate(dense):
            h = jnp.dot(h, w_ref[...],
                        preferred_element_type=jnp.float32) + b_ref[...]
            if i < num_dense - 1:
                h = jnp.maximum(h, 0.0)
        out_ref[...] = h                                            # lane-dense (Bp, 128)

    return kernel


# ----------------------------- parameter prep --------------------------------

def init_params(key, hidden_size, in_size, out_size, num_layers,
                l1=512, l2=256, l3=128):
    """PyTorch-style uniform init. RNN weights stored pre-transposed as (in, out);
    linear weights as (in, out); biases (1, out). b_ih and b_hh are combined."""
    params = {"rnn": [], "dense": []}
    k_rnn = 1.0 / jnp.sqrt(hidden_size)
    for layer in range(num_layers):
        d_in = in_size if layer == 0 else hidden_size
        key, k1, k2, k3, k4 = jax.random.split(key, 5)
        wih_t = jax.random.uniform(k1, (d_in, hidden_size), jnp.float32, -k_rnn, k_rnn)
        whh_t = jax.random.uniform(k2, (hidden_size, hidden_size), jnp.float32,
                                   -k_rnn, k_rnn)
        b_ih = jax.random.uniform(k3, (1, hidden_size), jnp.float32, -k_rnn, k_rnn)
        b_hh = jax.random.uniform(k4, (1, hidden_size), jnp.float32, -k_rnn, k_rnn)
        params["rnn"].append((wih_t, whh_t, b_ih + b_hh))

    dims = [(hidden_size, l1), (l1, l2), (l2, l3), (l3, out_size)]
    for (fan_in, fan_out) in dims:
        key, k1, k2 = jax.random.split(key, 3)
        bound = 1.0 / jnp.sqrt(fan_in)
        w = jax.random.uniform(k1, (fan_in, fan_out), jnp.float32, -bound, bound)
        b = jax.random.uniform(k2, (1, fan_out), jnp.float32, -bound, bound)
        params["dense"].append((w, b))
    return params


def prepare_padded_params(params):
    """Zero-pad all weights to lane-dense (multiple-of-128) widths and pre-stack
    [W_ih; W_hh] for RNN layers >= 1 so their two per-step matmuls fuse into one.
    Done once, outside jit."""
    rnn, dense = params["rnn"], params["dense"]
    H = rnn[0][1].shape[0]
    HP = _round_up(H)

    wih0, whh0, b0 = rnn[0]
    padded_rnn = [(_pad_to(wih0, wih0.shape[0], HP),   # (Din, HP)
                   _pad_to(whh0, HP, HP),              # (HP, HP)
                   _pad_to(b0, 1, HP))]                # (1, HP)
    for (wih, whh, b) in rnn[1:]:
        wstack = jnp.concatenate([_pad_to(wih, HP, HP), _pad_to(whh, HP, HP)], axis=0)
        padded_rnn.append((wstack, _pad_to(b, 1, HP)))

    padded_dense = []
    fan_in_pad = HP
    for (w, b) in dense:
        fan_out_pad = _round_up(w.shape[1])
        padded_dense.append((_pad_to(w, fan_in_pad, fan_out_pad),
                             _pad_to(b, 1, fan_out_pad)))
        fan_in_pad = fan_out_pad
    return {"rnn": padded_rnn, "dense": padded_dense}


# ----------------------------- forward (single pallas_call) ------------------

def rnn_forward(padded, x, out_size):
    """x: (B, T, in_size), batch_first (matches the PyTorch module)."""
    B, T, Din = x.shape
    hp = padded["rnn"][0][1].shape[0]
    num_layers = len(padded["rnn"])
    num_dense = len(padded["dense"])
    out_pad = padded["dense"][-1][0].shape[1]

    # Pad batch to a full sublane group so every per-step tensor is (8,128)-aligned.
    Bp = max(_SUBLANE, ((B + _SUBLANE - 1) // _SUBLANE) * _SUBLANE)
    xp = jnp.pad(x.astype(jnp.float32), ((0, Bp - B), (0, 0), (0, 0)))

    # time-major, flattened to (T*Bp, Din) so the input projection is one matmul.
    x2d = jnp.transpose(xp, (1, 0, 2)).reshape(T * Bp, Din)

    flat = [x2d]
    wih0, whh0, b0 = padded["rnn"][0]
    flat += [wih0, whh0, b0]
    for (wstack, b) in padded["rnn"][1:]:
        flat += [wstack, b]
    for (w, b) in padded["dense"]:
        flat += [w, b]

    vmem = pl.BlockSpec(memory_space=pltpu.MemorySpace.VMEM)
    out = pl.pallas_call(
        make_fused_kernel(num_layers, num_dense, T, Bp, hp),
        out_shape=jax.ShapeDtypeStruct((Bp, out_pad), jnp.float32),
        in_specs=[vmem] * len(flat),
        out_specs=vmem,
    )(*flat)
    return out[:B, :out_size]


# ----------------------------- pure-JAX reference ----------------------------

def rnn_forward_ref(params, x, out_size):
    h_seq = jnp.transpose(x, (1, 0, 2)).astype(jnp.float32)
    for (wih_t, whh_t, b) in params["rnn"]:
        T, B, _ = h_seq.shape
        H = whh_t.shape[1]

        def step(h, xt):
            h_new = jnp.tanh(xt @ wih_t + h @ whh_t + b)
            return h_new, h_new

        _, h_seq = lax.scan(step, jnp.zeros((B, H), jnp.float32), h_seq)
    out = jnp.maximum(h_seq[-1], 0.0)
    for i, (w, b) in enumerate(params["dense"]):
        out = out @ w + b
        if i < len(params["dense"]) - 1:
            out = jnp.maximum(out, 0.0)
    return out


# ----------------------------- main -------------------------------------------

if __name__ == "__main__":
    hidden_size, in_size, out_size, num_layers = 32, 8, 4, 2
    batch, seq = 2, 8

    key = jax.random.PRNGKey(0)
    key, pkey, xkey = jax.random.split(key, 3)
    params = init_params(pkey, hidden_size, in_size, out_size, num_layers)
    padded = prepare_padded_params(params)
    x = jax.random.normal(xkey, (batch, seq, in_size), jnp.float32)

    fwd = jax.jit(functools.partial(rnn_forward, out_size=out_size))
    y = fwd(padded, x)
    jax.block_until_ready(y)

    y_ref = rnn_forward_ref(params, x, out_size)
    assert y.shape == (batch, out_size)
    assert jnp.allclose(y, y_ref, atol=1e-4, rtol=1e-4), "mismatch vs JAX reference"

    print("KERNEL_OK")
</pallas_src>

<mosaic_0001>
module attributes {stable_mosaic.version = 11 : i64} {
  func.func @kernel(%arg0: memref<64x8xf32, #tpu.memory_space<vmem>>, %arg1: memref<8x128xf32, #tpu.memory_space<vmem>>, %arg2: memref<128x128xf32, #tpu.memory_space<vmem>>, %arg3: memref<1x128xf32, #tpu.memory_space<vmem>>, %arg4: memref<256x128xf32, #tpu.memory_space<vmem>>, %arg5: memref<1x128xf32, #tpu.memory_space<vmem>>, %arg6: memref<128x512xf32, #tpu.memory_space<vmem>>, %arg7: memref<1x512xf32, #tpu.memory_space<vmem>>, %arg8: memref<512x256xf32, #tpu.memory_space<vmem>>, %arg9: memref<1x256xf32, #tpu.memory_space<vmem>>, %arg10: memref<256x128xf32, #tpu.memory_space<vmem>>, %arg11: memref<1x128xf32, #tpu.memory_space<vmem>>, %arg12: memref<128x128xf32, #tpu.memory_space<vmem>>, %arg13: memref<1x128xf32, #tpu.memory_space<vmem>>, %arg14: memref<8x128xf32, #tpu.memory_space<vmem>>) attributes {dimension_semantics = [], scalar_prefetch = 0 : i64, scratch_operands = 0 : i64, tpu.core_type = #tpu.core_type<tc>} {
    %c0 = arith.constant 0 : index
    %c0_0 = arith.constant 0 : index
    %0 = vector.load %arg2[%c0, %c0_0] : memref<128x128xf32, #tpu.memory_space<vmem>>, vector<128x128xf32>
    %c0_1 = arith.constant 0 : index
    %c0_2 = arith.constant 0 : index
    %1 = vector.load %arg4[%c0_1, %c0_2] : memref<256x128xf32, #tpu.memory_space<vmem>>, vector<256x128xf32>
    %c0_3 = arith.constant 0 : index
    %c0_4 = arith.constant 0 : index
    %2 = vector.load %arg5[%c0_3, %c0_4] : memref<1x128xf32, #tpu.memory_space<vmem>>, vector<1x128xf32>
    %3 = vector.shape_cast %2 : vector<1x128xf32> to vector<1x128xf32>
    %4 = vector.broadcast %3 : vector<1x128xf32> to vector<8x128xf32>
    %c0_5 = arith.constant 0 : index
    %c0_6 = arith.constant 0 : index
    %5 = vector.load %arg0[%c0_5, %c0_6] : memref<64x8xf32, #tpu.memory_space<vmem>>, vector<64x8xf32>
    %c0_7 = arith.constant 0 : index
    %c0_8 = arith.constant 0 : index
    %6 = vector.load %arg1[%c0_7, %c0_8] : memref<8x128xf32, #tpu.memory_space<vmem>>, vector<8x128xf32>
    %cst = arith.constant dense<0.000000e+00> : vector<64x128xf32>
    %7 = tpu.matmul %5, %6, %cst {dimension_numbers = #tpu.dot_dimension_numbers<[1], [0], [0], [1], [0, 0, 1, 1], [], []>} : vector<64x8xf32>, vector<8x128xf32>, vector<64x128xf32> -> vector<64x128xf32>
    %c0_9 = arith.constant 0 : index
    %c0_10 = arith.constant 0 : index
    %8 = vector.load %arg3[%c0_9, %c0_10] : memref<1x128xf32, #tpu.memory_space<vmem>>, vector<1x128xf32>
    %9 = vector.broadcast %8 : vector<1x128xf32> to vector<64x128xf32>
    %10 = arith.addf %7, %9 : vector<64x128xf32>
    %cst_11 = arith.constant 0.000000e+00 : f32
    %11 = vector.broadcast %cst_11 : f32 to vector<8x128xf32>
    %cst_12 = arith.constant 0.000000e+00 : f32
    %12 = vector.broadcast %cst_12 : f32 to vector<8x128xf32>
    %13 = vector.extract_strided_slice %10 {offsets = [0, 0], sizes = [8, 128], strides = [1, 1]} : vector<64x128xf32> to vector<8x128xf32>
    %cst_13 = arith.constant dense<0.000000e+00> : vector<8x128xf32>
    %14 = tpu.matmul %11, %0, %cst_13 {dimension_numbers = #tpu.dot_dimension_numbers<[1], [0], [0], [1], [0, 0, 1, 1], [], []>} : vector<8x128xf32>, vector<128x128xf32>, vector<8x128xf32> -> vector<8x128xf32>
    %15 = arith.addf %13, %14 : vector<8x128xf32>
    %16 = math.tanh %15 : vector<8x128xf32>
    %17 = tpu.concatenate %16, %12 in 1 : vector<8x128xf32>, vector<8x128xf32> -> vector<8x256xf32>
    %cst_14 = arith.constant dense<0.000000e+00> : vector<8x128xf32>
    %18 = tpu.matmul %17, %1, %cst_14 {dimension_numbers = #tpu.dot_dimension_numbers<[1], [0], [0], [1], [0, 0, 1, 1], [], []>} : vector<8x256xf32>, vector<256x128xf32>, vector<8x128xf32> -> vector<8x128xf32>
    %19 = arith.addf %18, %4 : vector<8x128xf32>
    %20 = math.tanh %19 : vector<8x128xf32>
    %21 = vector.extract_strided_slice %10 {offsets = [8, 0], sizes = [8, 128], strides = [1, 1]} : vector<64x128xf32> to vector<8x128xf32>
    %cst_15 = arith.constant dense<0.000000e+00> : vector<8x128xf32>
    %22 = tpu.matmul %16, %0, %cst_15 {dimension_numbers = #tpu.dot_dimension_numbers<[1], [0], [0], [1], [0, 0, 1, 1], [], []>} : vector<8x128xf32>, vector<128x128xf32>, vector<8x128xf32> -> vector<8x128xf32>
    %23 = arith.addf %21, %22 : vector<8x128xf32>
    %24 = math.tanh %23 : vector<8x128xf32>
    %25 = tpu.concatenate %24, %20 in 1 : vector<8x128xf32>, vector<8x128xf32> -> vector<8x256xf32>
    %cst_16 = arith.constant dense<0.000000e+00> : vector<8x128xf32>
    %26 = tpu.matmul %25, %1, %cst_16 {dimension_numbers = #tpu.dot_dimension_numbers<[1], [0], [0], [1], [0, 0, 1, 1], [], []>} : vector<8x256xf32>, vector<256x128xf32>, vector<8x128xf32> -> vector<8x128xf32>
    %27 = arith.addf %26, %4 : vector<8x128xf32>
    %28 = math.tanh %27 : vector<8x128xf32>
    %29 = vector.extract_strided_slice %10 {offsets = [16, 0], sizes = [8, 128], strides = [1, 1]} : vector<64x128xf32> to vector<8x128xf32>
    %cst_17 = arith.constant dense<0.000000e+00> : vector<8x128xf32>
    %30 = tpu.matmul %24, %0, %cst_17 {dimension_numbers = #tpu.dot_dimension_numbers<[1], [0], [0], [1], [0, 0, 1, 1], [], []>} : vector<8x128xf32>, vector<128x128xf32>, vector<8x128xf32> -> vector<8x128xf32>
    %31 = arith.addf %29, %30 : vector<8x128xf32>
    %32 = math.tanh %31 : vector<8x128xf32>
    %33 = tpu.concatenate %32, %28 in 1 : vector<8x128xf32>, vector<8x128xf32> -> vector<8x256xf32>
    %cst_18 = arith.constant dense<0.000000e+00> : vector<8x128xf32>
    %34 = tpu.matmul %33, %1, %cst_18 {dimension_numbers = #tpu.dot_dimension_numbers<[1], [0], [0], [1], [0, 0, 1, 1], [], []>} : vector<8x256xf32>, vector<256x128xf32>, vector<8x128xf32> -> vector<8x128xf32>
    %35 = arith.addf %34, %4 : vector<8x128xf32>
    %36 = math.tanh %35 : vector<8x128xf32>
    %37 = vector.extract_strided_slice %10 {offsets = [24, 0], sizes = [8, 128], strides = [1, 1]} : vector<64x128xf32> to vector<8x128xf32>
    %cst_19 = arith.constant dense<0.000000e+00> : vector<8x128xf32>
    %38 = tpu.matmul %32, %0, %cst_19 {dimension_numbers = #tpu.dot_dimension_numbers<[1], [0], [0], [1], [0, 0, 1, 1], [], []>} : vector<8x128xf32>, vector<128x128xf32>, vector<8x128xf32> -> vector<8x128xf32>
    %39 = arith.addf %37, %38 : vector<8x128xf32>
    %40 = math.tanh %39 : vector<8x128xf32>
    %41 = tpu.concatenate %40, %36 in 1 : vector<8x128xf32>, vector<8x128xf32> -> vector<8x256xf32>
    %cst_20 = arith.constant dense<0.000000e+00> : vector<8x128xf32>
    %42 = tpu.matmul %41, %1, %cst_20 {dimension_numbers = #tpu.dot_dimension_numbers<[1], [0], [0], [1], [0, 0, 1, 1], [], []>} : vector<8x256xf32>, vector<256x128xf32>, vector<8x128xf32> -> vector<8x128xf32>
    %43 = arith.addf %42, %4 : vector<8x128xf32>
    %44 = math.tanh %43 : vector<8x128xf32>
    %45 = vector.extract_strided_slice %10 {offsets = [32, 0], sizes = [8, 128], strides = [1, 1]} : vector<64x128xf32> to vector<8x128xf32>
    %cst_21 = arith.constant dense<0.000000e+00> : vector<8x128xf32>
    %46 = tpu.matmul %40, %0, %cst_21 {dimension_numbers = #tpu.dot_dimension_numbers<[1], [0], [0], [1], [0, 0, 1, 1], [], []>} : vector<8x128xf32>, vector<128x128xf32>, vector<8x128xf32> -> vector<8x128xf32>
    %47 = arith.addf %45, %46 : vector<8x128xf32>
    %48 = math.tanh %47 : vector<8x128xf32>
    %49 = tpu.concatenate %48, %44 in 1 : vector<8x128xf32>, vector<8x128xf32> -> vector<8x256xf32>
    %cst_22 = arith.constant dense<0.000000e+00> : vector<8x128xf32>
    %50 = tpu.matmul %49, %1, %cst_22 {dimension_numbers = #tpu.dot_dimension_numbers<[1], [0], [0], [1], [0, 0, 1, 1], [], []>} : vector<8x256xf32>, vector<256x128xf32>, vector<8x128xf32> -> vector<8x128xf32>
    %51 = arith.addf %50, %4 : vector<8x128xf32>
    %52 = math.tanh %51 : vector<8x128xf32>
    %53 = vector.extract_strided_slice %10 {offsets = [40, 0], sizes = [8, 128], strides = [1, 1]} : vector<64x128xf32> to vector<8x128xf32>
    %cst_23 = arith.constant dense<0.000000e+00> : vector<8x128xf32>
    %54 = tpu.matmul %48, %0, %cst_23 {dimension_numbers = #tpu.dot_dimension_numbers<[1], [0], [0], [1], [0, 0, 1, 1], [], []>} : vector<8x128xf32>, vector<128x128xf32>, vector<8x128xf32> -> vector<8x128xf32>
    %55 = arith.addf %53, %54 : vector<8x128xf32>
    %56 = math.tanh %55 : vector<8x128xf32>
    %57 = tpu.concatenate %56, %52 in 1 : vector<8x128xf32>, vector<8x128xf32> -> vector<8x256xf32>
    %cst_24 = arith.constant dense<0.000000e+00> : vector<8x128xf32>
    %58 = tpu.matmul %57, %1, %cst_24 {dimension_numbers = #tpu.dot_dimension_numbers<[1], [0], [0], [1], [0, 0, 1, 1], [], []>} : vector<8x256xf32>, vector<256x128xf32>, vector<8x128xf32> -> vector<8x128xf32>
    %59 = arith.addf %58, %4 : vector<8x128xf32>
    %60 = math.tanh %59 : vector<8x128xf32>
    %61 = vector.extract_strided_slice %10 {offsets = [48, 0], sizes = [8, 128], strides = [1, 1]} : vector<64x128xf32> to vector<8x128xf32>
    %cst_25 = arith.constant dense<0.000000e+00> : vector<8x128xf32>
    %62 = tpu.matmul %56, %0, %cst_25 {dimension_numbers = #tpu.dot_dimension_numbers<[1], [0], [0], [1], [0, 0, 1, 1], [], []>} : vector<8x128xf32>, vector<128x128xf32>, vector<8x128xf32> -> vector<8x128xf32>
    %63 = arith.addf %61, %62 : vector<8x128xf32>
    %64 = math.tanh %63 : vector<8x128xf32>
    %65 = tpu.concatenate %64, %60 in 1 : vector<8x128xf32>, vector<8x128xf32> -> vector<8x256xf32>
    %cst_26 = arith.constant dense<0.000000e+00> : vector<8x128xf32>
    %66 = tpu.matmul %65, %1, %cst_26 {dimension_numbers = #tpu.dot_dimension_numbers<[1], [0], [0], [1], [0, 0, 1, 1], [], []>} : vector<8x256xf32>, vector<256x128xf32>, vector<8x128xf32> -> vector<8x128xf32>
    %67 = arith.addf %66, %4 : vector<8x128xf32>
    %68 = math.tanh %67 : vector<8x128xf32>
    %69 = vector.extract_strided_slice %10 {offsets = [56, 0], sizes = [8, 128], strides = [1, 1]} : vector<64x128xf32> to vector<8x128xf32>
    %cst_27 = arith.constant dense<0.000000e+00> : vector<8x128xf32>
    %70 = tpu.matmul %64, %0, %cst_27 {dimension_numbers = #tpu.dot_dimension_numbers<[1], [0], [0], [1], [0, 0, 1, 1], [], []>} : vector<8x128xf32>, vector<128x128xf32>, vector<8x128xf32> -> vector<8x128xf32>
    %71 = arith.addf %69, %70 : vector<8x128xf32>
    %72 = math.tanh %71 : vector<8x128xf32>
    %73 = tpu.concatenate %72, %68 in 1 : vector<8x128xf32>, vector<8x128xf32> -> vector<8x256xf32>
    %cst_28 = arith.constant dense<0.000000e+00> : vector<8x128xf32>
    %74 = tpu.matmul %73, %1, %cst_28 {dimension_numbers = #tpu.dot_dimension_numbers<[1], [0], [0], [1], [0, 0, 1, 1], [], []>} : vector<8x256xf32>, vector<256x128xf32>, vector<8x128xf32> -> vector<8x128xf32>
    %75 = arith.addf %74, %4 : vector<8x128xf32>
    %76 = math.tanh %75 : vector<8x128xf32>
    %cst_29 = arith.constant 0.000000e+00 : f32
    %77 = vector.broadcast %cst_29 : f32 to vector<8x128xf32>
    %78 = arith.maximumf %76, %77 : vector<8x128xf32>
    %c0_30 = arith.constant 0 : index
    %c0_31 = arith.constant 0 : index
    %79 = vector.load %arg6[%c0_30, %c0_31] : memref<128x512xf32, #tpu.memory_space<vmem>>, vector<128x512xf32>
    %cst_32 = arith.constant dense<0.000000e+00> : vector<8x512xf32>
    %80 = tpu.matmul %78, %79, %cst_32 {dimension_numbers = #tpu.dot_dimension_numbers<[1], [0], [0], [1], [0, 0, 1, 1], [], []>} : vector<8x128xf32>, vector<128x512xf32>, vector<8x512xf32> -> vector<8x512xf32>
    %c0_33 = arith.constant 0 : index
    %c0_34 = arith.constant 0 : index
    %81 = vector.load %arg7[%c0_33, %c0_34] : memref<1x512xf32, #tpu.memory_space<vmem>>, vector<1x512xf32>
    %82 = vector.broadcast %81 : vector<1x512xf32> to vector<8x512xf32>
    %83 = arith.addf %80, %82 : vector<8x512xf32>
    %cst_35 = arith.constant 0.000000e+00 : f32
    %84 = vector.broadcast %cst_35 : f32 to vector<8x512xf32>
    %85 = arith.maximumf %83, %84 : vector<8x512xf32>
    %c0_36 = arith.constant 0 : index
    %c0_37 = arith.constant 0 : index
    %86 = vector.load %arg8[%c0_36, %c0_37] : memref<512x256xf32, #tpu.memory_space<vmem>>, vector<512x256xf32>
    %cst_38 = arith.constant dense<0.000000e+00> : vector<8x256xf32>
    %87 = tpu.matmul %85, %86, %cst_38 {dimension_numbers = #tpu.dot_dimension_numbers<[1], [0], [0], [1], [0, 0, 1, 1], [], []>} : vector<8x512xf32>, vector<512x256xf32>, vector<8x256xf32> -> vector<8x256xf32>
    %c0_39 = arith.constant 0 : index
    %c0_40 = arith.constant 0 : index
    %88 = vector.load %arg9[%c0_39, %c0_40] : memref<1x256xf32, #tpu.memory_space<vmem>>, vector<1x256xf32>
    %89 = vector.broadcast %88 : vector<1x256xf32> to vector<8x256xf32>
    %90 = arith.addf %87, %89 : vector<8x256xf32>
    %cst_41 = arith.constant 0.000000e+00 : f32
    %91 = vector.broadcast %cst_41 : f32 to vector<8x256xf32>
    %92 = arith.maximumf %90, %91 : vector<8x256xf32>
    %c0_42 = arith.constant 0 : index
    %c0_43 = arith.constant 0 : index
    %93 = vector.load %arg10[%c0_42, %c0_43] : memref<256x128xf32, #tpu.memory_space<vmem>>, vector<256x128xf32>
    %cst_44 = arith.constant dense<0.000000e+00> : vector<8x128xf32>
    %94 = tpu.matmul %92, %93, %cst_44 {dimension_numbers = #tpu.dot_dimension_numbers<[1], [0], [0], [1], [0, 0, 1, 1], [], []>} : vector<8x256xf32>, vector<256x128xf32>, vector<8x128xf32> -> vector<8x128xf32>
    %c0_45 = arith.constant 0 : index
    %c0_46 = arith.constant 0 : index
    %95 = vector.load %arg11[%c0_45, %c0_46] : memref<1x128xf32, #tpu.memory_space<vmem>>, vector<1x128xf32>
    %96 = vector.broadcast %95 : vector<1x128xf32> to vector<8x128xf32>
    %97 = arith.addf %94, %96 : vector<8x128xf32>
    %cst_47 = arith.constant 0.000000e+00 : f32
    %98 = vector.broadcast %cst_47 : f32 to vector<8x128xf32>
    %99 = arith.maximumf %97, %98 : vector<8x128xf32>
    %c0_48 = arith.constant 0 : index
    %c0_49 = arith.constant 0 : index
    %100 = vector.load %arg12[%c0_48, %c0_49] : memref<128x128xf32, #tpu.memory_space<vmem>>, vector<128x128xf32>
    %cst_50 = arith.constant dense<0.000000e+00> : vector<8x128xf32>
    %101 = tpu.matmul %99, %100, %cst_50 {dimension_numbers = #tpu.dot_dimension_numbers<[1], [0], [0], [1], [0, 0, 1, 1], [], []>} : vector<8x128xf32>, vector<128x128xf32>, vector<8x128xf32> -> vector<8x128xf32>
    %c0_51 = arith.constant 0 : index
    %c0_52 = arith.constant 0 : index
    %102 = vector.load %arg13[%c0_51, %c0_52] : memref<1x128xf32, #tpu.memory_space<vmem>>, vector<1x128xf32>
    %103 = vector.broadcast %102 : vector<1x128xf32> to vector<8x128xf32>
    %104 = arith.addf %101, %103 : vector<8x128xf32>
    %c0_53 = arith.constant 0 : index
    %c0_54 = arith.constant 0 : index
    %105 = vector.load %arg14[%c0_53, %c0_54] : memref<8x128xf32, #tpu.memory_space<vmem>>, vector<8x128xf32>
    tpu.vector_store %arg14[%c0_53, %c0_54], %104 {strides = array<i32>} : memref<8x128xf32, #tpu.memory_space<vmem>>, vector<8x128xf32>,
    return
  }
}

</mosaic_0001>

<llo_original>
// kernel: rnn_forward.1
$region0: #{rnn_forward.1}
  #allocation0 [shape = 'u32[]', space=smem, size = 0x4, offset = 0x4, fixed_abs, tag = 'smem constant byte address 0x4 - core index']
  #allocation1 [shape = 'u32[144,128]{1,0:T(1,128)}', space=vmem, size = 0x12000, scoped, tag = 'internal scratch']
  %s0 = inlined_call_operand.vmem [shape: f32[64,8], index: 0, kind: input, shape index: {}]
  %s1 = inlined_call_operand.vmem [shape: f32[8,128], index: 1, kind: input, shape index: {}]
  %s2 = inlined_call_operand.vmem [shape: f32[128,128], index: 2, kind: input, shape index: {}]
  %s3 = inlined_call_operand.vmem [shape: f32[1,128], index: 3, kind: input, shape index: {}]
  %s4 = inlined_call_operand.hbm [shape: f32[256,128], index: 4, kind: input, shape index: {}]
  %s5 = inlined_call_operand.vmem [shape: f32[1,128], index: 5, kind: input, shape index: {}]
  %s6 = inlined_call_operand.hbm [shape: f32[128,512], index: 6, kind: input, shape index: {}]
  %s7 = inlined_call_operand.vmem [shape: f32[1,512], index: 7, kind: input, shape index: {}]
  %s8 = inlined_call_operand.hbm [shape: f32[512,256], index: 8, kind: input, shape index: {}]
  %s9 = inlined_call_operand.vmem [shape: f32[1,256], index: 9, kind: input, shape index: {}]
  %s10 = inlined_call_operand.hbm [shape: f32[256,128], index: 10, kind: input, shape index: {}]
  %s11 = inlined_call_operand.vmem [shape: f32[1,128], index: 11, kind: input, shape index: {}]
  %s12 = inlined_call_operand.hbm [shape: f32[128,128], index: 12, kind: input, shape index: {}]
  %s13 = inlined_call_operand.vmem [shape: f32[1,128], index: 13, kind: input, shape index: {}]
  %s14 = inlined_call_operand.vmem [shape: f32[8,128], index: 14, kind: output, shape index: {}]
  %s15 = sld [smem:[#allocation0]]
  $region86: #{rnn_forward.1} parent=0
    _
  %s17 = ssub.s32 1, %s15
  %s18 = scalar_select 0, %s17, %s15
  $region1: #{rnn_forward.1} parent=0
    #allocation2 [shape = 'u8[131072]{0}', space=vmem, size = 0x20000, scoped, tag = 'input window, operand 4, single buffered']
    #allocation3 [shape = 's32[1]{0}', space=sflag, size = 0x4, scoped, tag = 'scoped memory for rnn_forward.1']
    #allocation4 [shape = 'u8[262144]{0}', space=vmem, size = 0x40000, scoped, tag = 'input window, operand 6, single buffered']
    #allocation5 [shape = 's32[1]{0}', space=sflag, size = 0x4, scoped, tag = 'scoped memory for rnn_forward.1']
    #allocation6 [shape = 'u8[524288]{0}', space=vmem, size = 0x80000, scoped, tag = 'input window, operand 8, single buffered']
    #allocation7 [shape = 'u8[131072]{0}', space=vmem, size = 0x20000, scoped, tag = 'input window, operand 10, single buffered']
    #allocation8 [shape = 's32[1]{0}', space=sflag, size = 0x4, scoped, tag = 'scoped memory for rnn_forward.1']
    #allocation9 [shape = 'u8[65536]{0}', space=vmem, size = 0x10000, scoped, tag = 'input window, operand 12, single buffered']
    %19 = vsyncpa [#allocation3], 0
    %20 = vsyncpa [#allocation5], 0
    %21 = vsyncpa [#allocation8], 0
    // Predicated region
    $region2: #{rnn_forward.1} parent=1 // pred_check
      _
    $region3: #{rnn_forward.1} parent=1 // pred_check_branch
      %23 = sbr.rel (0) target = $region5
    $region4: #{rnn_forward.1} parent=1 // pred_region
      _
    $region5: #{rnn_forward.1} parent=1 // pred_fallthru
      _
    // Predicated region
    $region6: #{rnn_forward.1} parent=1 // pred_check
      _
    $region7: #{rnn_forward.1} parent=1 // pred_check_branch
      %25 = sbr.rel (0) target = $region9
    $region8: #{rnn_forward.1} parent=1 // pred_region
      _
    $region9: #{rnn_forward.1} parent=1 // pred_fallthru
      _
    // Predicated region
    $region10: #{rnn_forward.1} parent=1 // pred_check
      _
    $region11: #{rnn_forward.1} parent=1 // pred_check_branch
      %27 = sbr.rel (0) target = $region13
    $region12: #{rnn_forward.1} parent=1 // pred_region
      _
    $region13: #{rnn_forward.1} parent=1 // pred_fallthru
      _
    // Predicated region
    $region14: #{rnn_forward.1} parent=1 // pred_check
      _
    $region15: #{rnn_forward.1} parent=1 // pred_check_branch
      %29 = sbr.rel (0) target = $region17
    $region16: #{rnn_forward.1} parent=1 // pred_region
      _
    $region17: #{rnn_forward.1} parent=1 // pred_fallthru
      _
    // Predicated region
    $region18: #{rnn_forward.1} parent=1 // pred_check
      _
    $region19: #{rnn_forward.1} parent=1 // pred_check_branch
      %31 = sbr.rel (0) target = $region21
    $region20: #{rnn_forward.1} parent=1 // pred_region
      %s33 = ssub.s32 4096, 4096
      %34 = vsyncadd [#allocation3], %s33
      %s35 = sshll.u32 [#allocation2], 4
      %s36 = int_to_ptr.vmem [resolvable:$true] %s35
      %41 = dma.hbm_to_vmem [thread:$0]  %s4, 4096, %s36, [#allocation3], 128, 128, 8
    $region21: #{rnn_forward.1} parent=1 // pred_fallthru
      _
    // Predicated region
    $region22: #{rnn_forward.1} parent=1 // pred_check
      _
    $region23: #{rnn_forward.1} parent=1 // pred_check_branch
      %43 = sbr.rel (0) target = $region25
    $region24: #{rnn_forward.1} parent=1 // pred_region
      _
    $region25: #{rnn_forward.1} parent=1 // pred_fallthru
      _
    // Predicated region
    $region26: #{rnn_forward.1} parent=1 // pred_check
      _
    $region27: #{rnn_forward.1} parent=1 // pred_check_branch
      %45 = sbr.rel (0) target = $region29
    $region28: #{rnn_forward.1} parent=1 // pred_region
      %s47 = ssub.s32 8192, 8192
      %48 = vsyncadd [#allocation5], %s47
      %s49 = sshll.u32 [#allocation4], 4
      %s50 = int_to_ptr.vmem [resolvable:$true] %s49
      %55 = dma.hbm_to_vmem [thread:$0]  %s6, 8192, %s50, [#allocation5], 512, 512, 32
    $region29: #{rnn_forward.1} parent=1 // pred_fallthru
      _
    // Predicated region
    $region30: #{rnn_forward.1} parent=1 // pred_check
      _
    $region31: #{rnn_forward.1} parent=1 // pred_check_branch
      %57 = sbr.rel (0) target = $region33
    $region32: #{rnn_forward.1} parent=1 // pred_region
      _
    $region33: #{rnn_forward.1} parent=1 // pred_fallthru
      _
    // Predicated region
    $region34: #{rnn_forward.1} parent=1 // pred_check
      _
    $region35: #{rnn_forward.1} parent=1 // pred_check_branch
      %59 = sbr.rel (0) target = $region37
    $region36: #{rnn_forward.1} parent=1 // pred_region
      %s61 = ssub.s32 16384, 16384
      %62 = vsyncadd [#allocation5], %s61
      %s63 = sshll.u32 [#allocation6], 4
      %s64 = int_to_ptr.vmem [resolvable:$true] %s63
      %69 = dma.hbm_to_vmem [thread:$0]  %s8, 16384, %s64, [#allocation5], 256, 256, 16
    $region37: #{rnn_forward.1} parent=1 // pred_fallthru
      _
    // Predicated region
    $region38: #{rnn_forward.1} parent=1 // pred_check
      _
    $region39: #{rnn_forward.1} parent=1 // pred_check_branch
      %71 = sbr.rel (0) target = $region41
    $region40: #{rnn_forward.1} parent=1 // pred_region
      _
    $region41: #{rnn_forward.1} parent=1 // pred_fallthru
      _
    // Predicated region
    $region42: #{rnn_forward.1} parent=1 // pred_check
      _
    $region43: #{rnn_forward.1} parent=1 // pred_check_branch
      %73 = sbr.rel (0) target = $region45
    $region44: #{rnn_forward.1} parent=1 // pred_region
      %s75 = ssub.s32 4096, 4096
      %76 = vsyncadd [#allocation8], %s75
      %s77 = sshll.u32 [#allocation7], 4
      %s78 = int_to_ptr.vmem [resolvable:$true] %s77
      %83 = dma.hbm_to_vmem [thread:$0]  %s10, 4096, %s78, [#allocation8], 128, 128, 8
    $region45: #{rnn_forward.1} parent=1 // pred_fallthru
      _
    // Predicated region
    $region46: #{rnn_forward.1} parent=1 // pred_check
      _
    $region47: #{rnn_forward.1} parent=1 // pred_check_branch
      %85 = sbr.rel (0) target = $region49
    $region48: #{rnn_forward.1} parent=1 // pred_region
      _
    $region49: #{rnn_forward.1} parent=1 // pred_fallthru
      _
    // Predicated region
    $region50: #{rnn_forward.1} parent=1 // pred_check
      _
    $region51: #{rnn_forward.1} parent=1 // pred_check_branch
      %87 = sbr.rel (0) target = $region53
    $region52: #{rnn_forward.1} parent=1 // pred_region
      %s89 = ssub.s32 2048, 2048
      %90 = vsyncadd [#allocation8], %s89
      %s91 = sshll.u32 [#allocation9], 4
      %s92 = int_to_ptr.vmem [resolvable:$true] %s91
      %97 = dma.hbm_to_vmem [thread:$0]  %s12, 2048, %s92, [#allocation8], 128, 128, 8
    $region53: #{rnn_forward.1} parent=1 // pred_fallthru
      _
    // Predicated region
    $region54: #{rnn_forward.1} parent=1 // pred_check
      _
    $region55: #{rnn_forward.1} parent=1 // pred_check_branch
      %99 = sbr.rel (0) target = $region57
    $region56: #{rnn_forward.1} parent=1 // pred_region
      _
    $region57: #{rnn_forward.1} parent=1 // pred_fallthru
      _
    // Predicated region
    $region58: #{rnn_forward.1} parent=1 // pred_check
      _
    $region59: #{rnn_forward.1} parent=1 // pred_check_branch
      %101 = sbr.rel (0) target = $region61
    $region60: #{rnn_forward.1} parent=1 // pred_region
      %102 = dma.done [#allocation3], 4096
    $region61: #{rnn_forward.1} parent=1 // pred_fallthru
      _
    // Predicated region
    $region62: #{rnn_forward.1} parent=1 // pred_check
      _
    $region63: #{rnn_forward.1} parent=1 // pred_check_branch
      %104 = sbr.rel (0) target = $region65
    $region64: #{rnn_forward.1} parent=1 // pred_region
      %105 = dma.done [#allocation5], 8192
    $region65: #{rnn_forward.1} parent=1 // pred_fallthru
      _
    // Predicated region
    $region66: #{rnn_forward.1} parent=1 // pred_check
      _
    $region67: #{rnn_forward.1} parent=1 // pred_check_branch
      %107 = sbr.rel (0) target = $region69
    $region68: #{rnn_forward.1} parent=1 // pred_region
      %108 = dma.done [#allocation5], 16384
    $region69: #{rnn_forward.1} parent=1 // pred_fallthru
      _
    // Predicated region
    $region70: #{rnn_forward.1} parent=1 // pred_check
      _
    $region71: #{rnn_forward.1} parent=1 // pred_check_branch
      %110 = sbr.rel (0) target = $region73
    $region72: #{rnn_forward.1} parent=1 // pred_region
      %111 = dma.done [#allocation8], 4096
    $region73: #{rnn_forward.1} parent=1 // pred_fallthru
      _
    // Predicated region
    $region74: #{rnn_forward.1} parent=1 // pred_check
      _
    $region75: #{rnn_forward.1} parent=1 // pred_check_branch
      %113 = sbr.rel (0) target = $region77
    $region76: #{rnn_forward.1} parent=1 // pred_region
      %114 = dma.done [#allocation8], 2048
    $region77: #{rnn_forward.1} parent=1 // pred_fallthru
      _
    %v115 = vld [vmem:[%s2] sm:$0xff]
    %v116 = vld [vmem:[%s2 + $0x8] sm:$0xff]
    %v117 = vld [vmem:[%s2 + $0x10] sm:$0xff]
    %v118 = vld [vmem:[%s2 + $0x18] sm:$0xff]
    %v119 = vld [vmem:[%s2 + $0x20] sm:$0xff]
    %v120 = vld [vmem:[%s2 + $0x28] sm:$0xff]
    %v121 = vld [vmem:[%s2 + $0x30] sm:$0xff]
    %v122 = vld [vmem:[%s2 + $0x38] sm:$0xff]
    %v123 = vld [vmem:[%s2 + $0x40] sm:$0xff]
    %v124 = vld [vmem:[%s2 + $0x48] sm:$0xff]
    %v125 = vld [vmem:[%s2 + $0x50] sm:$0xff]
    %v126 = vld [vmem:[%s2 + $0x58] sm:$0xff]
    %v127 = vld [vmem:[%s2 + $0x60] sm:$0xff]
    %v128 = vld [vmem:[%s2 + $0x68] sm:$0xff]
    %v129 = vld [vmem:[%s2 + $0x70] sm:$0xff]
    %v130 = vld [vmem:[%s2 + $0x78] sm:$0xff]
    %v131 = vld [vmem:[#allocation2] sm:$0xff]
    %v132 = vld [vmem:[#allocation2 + $0x8] sm:$0xff]
    %v133 = vld [vmem:[#allocation2 + $0x10] sm:$0xff]
    %v134 = vld [vmem:[#allocation2 + $0x18] sm:$0xff]
    %v135 = vld [vmem:[#allocation2 + $0x20] sm:$0xff]
    %v136 = vld [vmem:[#allocation2 + $0x28] sm:$0xff]
    %v137 = vld [vmem:[#allocation2 + $0x30] sm:$0xff]
    %v138 = vld [vmem:[#allocation2 + $0x38] sm:$0xff]
    %v139 = vld [vmem:[#allocation2 + $0x40] sm:$0xff]
    %v140 = vld [vmem:[#allocation2 + $0x48] sm:$0xff]
    %v141 = vld [vmem:[#allocation2 + $0x50] sm:$0xff]
    %v142 = vld [vmem:[#allocation2 + $0x58] sm:$0xff]
    %v143 = vld [vmem:[#allocation2 + $0x60] sm:$0xff]
    %v144 = vld [vmem:[#allocation2 + $0x68] sm:$0xff]
    %v145 = vld [vmem:[#allocation2 + $0x70] sm:$0xff]
    %v146 = vld [vmem:[#allocation2 + $0x78] sm:$0xff]
    %v147 = vld [vmem:[#allocation2 + $0x80] sm:$0xff]
    %v148 = vld [vmem:[#allocation2 + $0x88] sm:$0xff]
    %v149 = vld [vmem:[#allocation2 + $0x90] sm:$0xff]
    %v150 = vld [vmem:[#allocation2 + $0x98] sm:$0xff]
    %v151 = vld [vmem:[#allocation2 + $0xa0] sm:$0xff]
    %v152 = vld [vmem:[#allocation2 + $0xa8] sm:$0xff]
    %v153 = vld [vmem:[#allocation2 + $0xb0] sm:$0xff]
    %v154 = vld [vmem:[#allocation2 + $0xb8] sm:$0xff]
    %v155 = vld [vmem:[#allocation2 + $0xc0] sm:$0xff]
    %v156 = vld [vmem:[#allocation2 + $0xc8] sm:$0xff]
    %v157 = vld [vmem:[#allocation2 + $0xd0] sm:$0xff]
    %v158 = vld [vmem:[#allocation2 + $0xd8] sm:$0xff]
    %v159 = vld [vmem:[#allocation2 + $0xe0] sm:$0xff]
    %v160 = vld [vmem:[#allocation2 + $0xe8] sm:$0xff]
    %v161 = vld [vmem:[#allocation2 + $0xf0] sm:$0xff]
    %v162 = vld [vmem:[#allocation2 + $0xf8] sm:$0xff]
    %v163 = vld [vmem:[%s5] sm:$0x1]
    %v165 = vlaneseq
    %v166 = vshrl.u32 %v165, 7
    %v167 = vsub.s32 0, %v166
    %v168 = vrot.slane %v163, %v167
    %v170 = vld [vmem:[%s0] sm:$0xff]
    %v171 = vld [vmem:[%s0 + $0x8] sm:$0xff]
    %v172 = vld [vmem:[%s0 + $0x10] sm:$0xff]
    %v173 = vld [vmem:[%s0 + $0x18] sm:$0xff]
    %v174 = vld [vmem:[%s0 + $0x20] sm:$0xff]
    %v175 = vld [vmem:[%s0 + $0x28] sm:$0xff]
    %v176 = vld [vmem:[%s0 + $0x30] sm:$0xff]
    %v177 = vld [vmem:[%s0 + $0x38] sm:$0xff]
    %v178 = vld [vmem:[%s1] sm:$0xff]
    %v179 = vld [vmem:[%s3] sm:$0x1]
    %v181 = vlaneseq
    %v182 = vshrl.u32 %v181, 7
    %v183 = vsub.s32 0, %v182
    %v184 = vrot.slane %v179, %v183
    %vm186 = vcmask 64512
    %v188 = vsel %vm186, %v170, 0
    %v191 = vsel %vm186, %v171, 0
    %v194 = vsel %vm186, %v172, 0
    %v197 = vsel %vm186, %v173, 0
    %v200 = vsel %vm186, %v174, 0
    %v203 = vsel %vm186, %v175, 0
    %v206 = vsel %vm186, %v176, 0
    %v209 = vsel %vm186, %v177, 0
    %211 = vmatprep.subr.mxu0 0.0
    %212 = vmatpush1.msra.mxu0 0.0
    %213 = vmatprep.subr.mxu0 0.0
    %214 = vmatpush1.msra.mxu0 0.0
    %215 = vmatprep.subr.mxu0 0.0
    %216 = vmatpush1.msra.mxu0 0.0
    %217 = vmatprep.subr.mxu0 0.0
    %218 = vmatpush1.msra.mxu0 0.0
    %219 = vmatprep.subr.mxu0 0.0
    %220 = vmatpush1.msra.mxu0 0.0
    %221 = vmatprep.subr.mxu0 0.0
    %222 = vmatpush1.msra.mxu0 0.0
    %223 = vmatprep.subr.mxu0 0.0
    %224 = vmatpush1.msra.mxu0 0.0
    %225 = vmatprep.subr.mxu0 0.0
    %226 = vmatpush1.msra.mxu0 0.0
    %227 = vmatprep.subr.mxu0 0.0
    %228 = vmatpush1.msra.mxu0 0.0
    %229 = vmatprep.subr.mxu0 0.0
    %230 = vmatpush1.msra.mxu0 0.0
    %231 = vmatprep.subr.mxu0 0.0
    %232 = vmatpush1.msra.mxu0 0.0
    %233 = vmatprep.subr.mxu0 0.0
    %234 = vmatpush1.msra.mxu0 0.0
    %235 = vmatprep.subr.mxu0 0.0
    %236 = vmatpush1.msra.mxu0 0.0
    %237 = vmatprep.subr.mxu0 0.0
    %238 = vmatpush1.msra.mxu0 0.0
    %239 = vmatprep.subr.mxu0 0.0
    %240 = vmatpush1.msra.mxu0 0.0
    %241 = vmatprep.subr.mxu0 0.0
    %242 = vmatpush1.msra.mxu0 %v178
    %243 = vmatprep.subr.mxu0 0.0
    %244 = vmatpush2.msra.mxu0 0.0
    %245 = vmatprep.subr.mxu0 0.0
    %246 = vmatpush2.msra.mxu0 0.0
    %247 = vmatprep.subr.mxu0 0.0
    %248 = vmatpush2.msra.mxu0 0.0
    %249 = vmatprep.subr.mxu0 0.0
    %250 = vmatpush2.msra.mxu0 0.0
    %251 = vmatprep.subr.mxu0 0.0
    %252 = vmatpush2.msra.mxu0 0.0
    %253 = vmatprep.subr.mxu0 0.0
    %254 = vmatpush2.msra.mxu0 0.0
    %255 = vmatprep.subr.mxu0 0.0
    %256 = vmatpush2.msra.mxu0 0.0
    %257 = vmatprep.subr.mxu0 0.0
    %258 = vmatpush2.msra.mxu0 0.0
    %259 = vmatprep.subr.mxu0 0.0
    %260 = vmatpush2.msra.mxu0 0.0
    %261 = vmatprep.subr.mxu0 0.0
    %262 = vmatpush2.msra.mxu0 0.0
    %263 = vmatprep.subr.mxu0 0.0
    %264 = vmatpush2.msra.mxu0 0.0
    %265 = vmatprep.subr.mxu0 0.0
    %266 = vmatpush2.msra.mxu0 0.0
    %267 = vmatprep.subr.mxu0 0.0
    %268 = vmatpush2.msra.mxu0 0.0
    %269 = vmatprep.subr.mxu0 0.0
    %270 = vmatpush2.msra.mxu0 0.0
    %271 = vmatprep.subr.mxu0 0.0
    %272 = vmatpush2.msra.mxu0 0.0
    %273 = vmatprep.subr.mxu0 0.0
    %274 = vmatpush2.msra.mxu0 0.0
    %275 = vmatprep.mubr.f32.mxu0 0.0
    %276 = vmatmul.mubr.f32.gmra.mxu0 %v188
    %v277 = vpop.f32.mrf.mxu0
    %v278 = vadd.f32 %v184, %v277
    %v279 = vpop.f32.mrf.mxu0
    %280 = vmatprep.mubr.f32.mxu0 0.0
    %281 = vmatmul.mubr.f32.gmra.mxu0 %v191
    %v282 = vpop.f32.mrf.mxu0
    %v283 = vadd.f32 %v184, %v282
    %v284 = vpop.f32.mrf.mxu0
    %285 = vmatprep.mubr.f32.mxu0 0.0
    %286 = vmatmul.mubr.f32.gmra.mxu0 %v194
    %v287 = vpop.f32.mrf.mxu0
    %v288 = vadd.f32 %v184, %v287
    %v289 = vpop.f32.mrf.mxu0
    %290 = vmatprep.mubr.f32.mxu0 0.0
    %291 = vmatmul.mubr.f32.gmra.mxu0 %v197
    %v292 = vpop.f32.mrf.mxu0
    %v293 = vadd.f32 %v184, %v292
    %v294 = vpop.f32.mrf.mxu0
    %295 = vmatprep.mubr.f32.mxu0 0.0
    %296 = vmatmul.mubr.f32.gmra.mxu0 %v200
    %v297 = vpop.f32.mrf.mxu0
    %v298 = vadd.f32 %v184, %v297
    %v299 = vpop.f32.mrf.mxu0
    %300 = vmatprep.mubr.f32.mxu0 0.0
    %301 = vmatmul.mubr.f32.gmra.mxu0 %v203
    %v302 = vpop.f32.mrf.mxu0
    %v303 = vadd.f32 %v184, %v302
    %v304 = vpop.f32.mrf.mxu0
    %305 = vmatprep.mubr.f32.mxu0 0.0
    %306 = vmatmul.mubr.f32.gmra.mxu0 %v206
    %v307 = vpop.f32.mrf.mxu0
    %v308 = vadd.f32 %v184, %v307
    %v309 = vpop.f32.mrf.mxu0
    %310 = vmatprep.mubr.f32.mxu0 0.0
    %311 = vmatmul.mubr.f32.gmra.mxu0 %v209
    %v312 = vpop.f32.mrf.mxu0
    %v313 = vadd.f32 %v184, %v312
    %v314 = vpop.f32.mrf.mxu0
    %315 = vdwg.mxu0
    %316 = vmatprep.subr.mxu0 0.0
    %317 = vmatpush1.msra.mxu0 %v130
    %318 = vmatprep.subr.mxu0 0.0
    %319 = vmatpush1.msra.mxu0 %v129
    %320 = vmatprep.subr.mxu0 0.0
    %321 = vmatpush1.msra.mxu0 %v128
    %322 = vmatprep.subr.mxu0 0.0
    %323 = vmatpush1.msra.mxu0 %v127
    %324 = vmatprep.subr.mxu0 0.0
    %325 = vmatpush1.msra.mxu0 %v126
    %326 = vmatprep.subr.mxu0 0.0
    %327 = vmatpush1.msra.mxu0 %v125
    %328 = vmatprep.subr.mxu0 0.0
    %329 = vmatpush1.msra.mxu0 %v124
    %330 = vmatprep.subr.mxu0 0.0
    %331 = vmatpush1.msra.mxu0 %v123
    %332 = vmatprep.subr.mxu0 0.0
    %333 = vmatpush1.msra.mxu0 %v122
    %334 = vmatprep.subr.mxu0 0.0
    %335 = vmatpush1.msra.mxu0 %v121
    %336 = vmatprep.subr.mxu0 0.0
    %337 = vmatpush1.msra.mxu0 %v120
    %338 = vmatprep.subr.mxu0 0.0
    %339 = vmatpush1.msra.mxu0 %v119
    %340 = vmatprep.subr.mxu0 0.0
    %341 = vmatpush1.msra.mxu0 %v118
    %342 = vmatprep.subr.mxu0 0.0
    %343 = vmatpush1.msra.mxu0 %v117
    %344 = vmatprep.subr.mxu0 0.0
    %345 = vmatpush1.msra.mxu0 %v116
    %346 = vmatprep.subr.mxu0 0.0
    %347 = vmatpush1.msra.mxu0 %v115
    %348 = vmatprep.subr.mxu0 0.0
    %349 = vmatpush2.msra.mxu0 0.0
    %350 = vmatprep.subr.mxu0 0.0
    %351 = vmatpush2.msra.mxu0 0.0
    %352 = vmatprep.subr.mxu0 0.0
    %353 = vmatpush2.msra.mxu0 0.0
    %354 = vmatprep.subr.mxu0 0.0
    %355 = vmatpush2.msra.mxu0 0.0
    %356 = vmatprep.subr.mxu0 0.0
    %357 = vmatpush2.msra.mxu0 0.0
    %358 = vmatprep.subr.mxu0 0.0
    %359 = vmatpush2.msra.mxu0 0.0
    %360 = vmatprep.subr.mxu0 0.0
    %361 = vmatpush2.msra.mxu0 0.0
    %362 = vmatprep.subr.mxu0 0.0
    %363 = vmatpush2.msra.mxu0 0.0
    %364 = vmatprep.subr.mxu0 0.0
    %365 = vmatpush2.msra.mxu0 0.0
    %366 = vmatprep.subr.mxu0 0.0
    %367 = vmatpush2.msra.mxu0 0.0
    %368 = vmatprep.subr.mxu0 0.0
    %369 = vmatpush2.msra.mxu0 0.0
    %370 = vmatprep.subr.mxu0 0.0
    %371 = vmatpush2.msra.mxu0 0.0
    %372 = vmatprep.subr.mxu0 0.0
    %373 = vmatpush2.msra.mxu0 0.0
    %374 = vmatprep.subr.mxu0 0.0
    %375 = vmatpush2.msra.mxu0 0.0
    %376 = vmatprep.subr.mxu0 0.0
    %377 = vmatpush2.msra.mxu0 0.0
    %378 = vmatprep.subr.mxu0 0.0
    %379 = vmatpush2.msra.mxu0 0.0
    %380 = vmatprep.mubr.f32.mxu0 0.0
    %381 = vmatmul.mubr.f32.gmra.mxu0 0.0
    %v382 = vpop.f32.mrf.mxu0
    %v383 = vadd.f32 0.0, %v382
    %v384 = vpop.f32.mrf.mxu0
    %385 = vdwg.mxu0
    %v386 = vadd.f32 %v278, %v383
    %v387 = vtanh.pop %v386
    %388 = vmatprep.subr.mxu0 0.0
    %389 = vmatpush1.msra.mxu0 %v146
    %390 = vmatprep.subr.mxu0 0.0
    %391 = vmatpush1.msra.mxu0 %v145
    %392 = vmatprep.subr.mxu0 0.0
    %393 = vmatpush1.msra.mxu0 %v144
    %394 = vmatprep.subr.mxu0 0.0
    %395 = vmatpush1.msra.mxu0 %v143
    %396 = vmatprep.subr.mxu0 0.0
    %397 = vmatpush1.msra.mxu0 %v142
    %398 = vmatprep.subr.mxu0 0.0
    %399 = vmatpush1.msra.mxu0 %v141
    %400 = vmatprep.subr.mxu0 0.0
    %401 = vmatpush1.msra.mxu0 %v140
    %402 = vmatprep.subr.mxu0 0.0
    %403 = vmatpush1.msra.mxu0 %v139
    %404 = vmatprep.subr.mxu0 0.0
    %405 = vmatpush1.msra.mxu0 %v138
    %406 = vmatprep.subr.mxu0 0.0
    %407 = vmatpush1.msra.mxu0 %v137
    %408 = vmatprep.subr.mxu0 0.0
    %409 = vmatpush1.msra.mxu0 %v136
    %410 = vmatprep.subr.mxu0 0.0
    %411 = vmatpush1.msra.mxu0 %v135
    %412 = vmatprep.subr.mxu0 0.0
    %413 = vmatpush1.msra.mxu0 %v134
    %414 = vmatprep.subr.mxu0 0.0
    %415 = vmatpush1.msra.mxu0 %v133
    %416 = vmatprep.subr.mxu0 0.0
    %417 = vmatpush1.msra.mxu0 %v132
    %418 = vmatprep.subr.mxu0 0.0
    %419 = vmatpush1.msra.mxu0 %v131
    %420 = vmatprep.subr.mxu0 0.0
    %421 = vmatpush2.msra.mxu0 %v162
    %422 = vmatprep.subr.mxu0 0.0
    %423 = vmatpush2.msra.mxu0 %v161
    %424 = vmatprep.subr.mxu0 0.0
    %425 = vmatpush2.msra.mxu0 %v160
    %426 = vmatprep.subr.mxu0 0.0
    %427 = vmatpush2.msra.mxu0 %v159
    %428 = vmatprep.subr.mxu0 0.0
    %429 = vmatpush2.msra.mxu0 %v158
    %430 = vmatprep.subr.mxu0 0.0
    %431 = vmatpush2.msra.mxu0 %v157
    %432 = vmatprep.subr.mxu0 0.0
    %433 = vmatpush2.msra.mxu0 %v156
    %434 = vmatprep.subr.mxu0 0.0
    %435 = vmatpush2.msra.mxu0 %v155
    %436 = vmatprep.subr.mxu0 0.0
    %437 = vmatpush2.msra.mxu0 %v154
    %438 = vmatprep.subr.mxu0 0.0
    %439 = vmatpush2.msra.mxu0 %v153
    %440 = vmatprep.subr.mxu0 0.0
    %441 = vmatpush2.msra.mxu0 %v152
    %442 = vmatprep.subr.mxu0 0.0
    %443 = vmatpush2.msra.mxu0 %v151
    %444 = vmatprep.subr.mxu0 0.0
    %445 = vmatpush2.msra.mxu0 %v150
    %446 = vmatprep.subr.mxu0 0.0
    %447 = vmatpush2.msra.mxu0 %v149
    %448 = vmatprep.subr.mxu0 0.0
    %449 = vmatpush2.msra.mxu0 %v148
    %450 = vmatprep.subr.mxu0 0.0
    %451 = vmatpush2.msra.mxu0 %v147
    %452 = vmatprep.mubr.f32.mxu0 0.0
    %453 = vmatmul.mubr.f32.gmra.mxu0 %v387
    %v454 = vpop.f32.mrf.mxu0
    %v455 = vadd.f32 %v168, %v454
    %v456 = vpop.f32.mrf.mxu0
    %457 = vdwg.mxu0
    %v458 = vtanh.pop %v455
    %459 = vmatprep.subr.mxu0 0.0
    %460 = vmatpush1.msra.mxu0 %v130
    %461 = vmatprep.subr.mxu0 0.0
    %462 = vmatpush1.msra.mxu0 %v129
    %463 = vmatprep.subr.mxu0 0.0
    %464 = vmatpush1.msra.mxu0 %v128
    %465 = vmatprep.subr.mxu0 0.0
    %466 = vmatpush1.msra.mxu0 %v127
    %467 = vmatprep.subr.mxu0 0.0
    %468 = vmatpush1.msra.mxu0 %v126
    %469 = vmatprep.subr.mxu0 0.0
    %470 = vmatpush1.msra.mxu0 %v125
    %471 = vmatprep.subr.mxu0 0.0
    %472 = vmatpush1.msra.mxu0 %v124
    %473 = vmatprep.subr.mxu0 0.0
    %474 = vmatpush1.msra.mxu0 %v123
    %475 = vmatprep.subr.mxu0 0.0
    %476 = vmatpush1.msra.mxu0 %v122
    %477 = vmatprep.subr.mxu0 0.0
    %478 = vmatpush1.msra.mxu0 %v121
    %479 = vmatprep.subr.mxu0 0.0
    %480 = vmatpush1.msra.mxu0 %v120
    %481 = vmatprep.subr.mxu0 0.0
    %482 = vmatpush1.msra.mxu0 %v119
    %483 = vmatprep.subr.mxu0 0.0
    %484 = vmatpush1.msra.mxu0 %v118
    %485 = vmatprep.subr.mxu0 0.0
    %486 = vmatpush1.msra.mxu0 %v117
    %487 = vmatprep.subr.mxu0 0.0
    %488 = vmatpush1.msra.mxu0 %v116
    %489 = vmatprep.subr.mxu0 0.0
    %490 = vmatpush1.msra.mxu0 %v115
    %491 = vmatprep.subr.mxu0 0.0
    %492 = vmatpush2.msra.mxu0 0.0
    %493 = vmatprep.subr.mxu0 0.0
    %494 = vmatpush2.msra.mxu0 0.0
    %495 = vmatprep.subr.mxu0 0.0
    %496 = vmatpush2.msra.mxu0 0.0
    %497 = vmatprep.subr.mxu0 0.0
    %498 = vmatpush2.msra.mxu0 0.0
    %499 = vmatprep.subr.mxu0 0.0
    %500 = vmatpush2.msra.mxu0 0.0
    %501 = vmatprep.subr.mxu0 0.0
    %502 = vmatpush2.msra.mxu0 0.0
    %503 = vmatprep.subr.mxu0 0.0
    %504 = vmatpush2.msra.mxu0 0.0
    %505 = vmatprep.subr.mxu0 0.0
    %506 = vmatpush2.msra.mxu0 0.0
    %507 = vmatprep.subr.mxu0 0.0
    %508 = vmatpush2.msra.mxu0 0.0
    %509 = vmatprep.subr.mxu0 0.0
    %510 = vmatpush2.msra.mxu0 0.0
    %511 = vmatprep.subr.mxu0 0.0
    %512 = vmatpush2.msra.mxu0 0.0
    %513 = vmatprep.subr.mxu0 0.0
    %514 = vmatpush2.msra.mxu0 0.0
    %515 = vmatprep.subr.mxu0 0.0
    %516 = vmatpush2.msra.mxu0 0.0
    %517 = vmatprep.subr.mxu0 0.0
    %518 = vmatpush2.msra.mxu0 0.0
    %519 = vmatprep.subr.mxu0 0.0
    %520 = vmatpush2.msra.mxu0 0.0
    %521 = vmatprep.subr.mxu0 0.0
    %522 = vmatpush2.msra.mxu0 0.0
    %523 = vmatprep.mubr.f32.mxu0 0.0
    %524 = vmatmul.mubr.f32.gmra.mxu0 %v387
    %v525 = vpop.f32.mrf.mxu0
    %v526 = vadd.f32 0.0, %v525
    %v527 = vpop.f32.mrf.mxu0
    %528 = vdwg.mxu0
    %v529 = vadd.f32 %v283, %v526
    %v530 = vtanh.pop %v529
    %531 = vmatprep.subr.mxu0 0.0
    %532 = vmatpush1.msra.mxu0 %v146
    %533 = vmatprep.subr.mxu0 0.0
    %534 = vmatpush1.msra.mxu0 %v145
    %535 = vmatprep.subr.mxu0 0.0
    %536 = vmatpush1.msra.mxu0 %v144
    %537 = vmatprep.subr.mxu0 0.0
    %538 = vmatpush1.msra.mxu0 %v143
    %539 = vmatprep.subr.mxu0 0.0
    %540 = vmatpush1.msra.mxu0 %v142
    %541 = vmatprep.subr.mxu0 0.0
    %542 = vmatpush1.msra.mxu0 %v141
    %543 = vmatprep.subr.mxu0 0.0
    %544 = vmatpush1.msra.mxu0 %v140
    %545 = vmatprep.subr.mxu0 0.0
    %546 = vmatpush1.msra.mxu0 %v139
    %547 = vmatprep.subr.mxu0 0.0
    %548 = vmatpush1.msra.mxu0 %v138
    %549 = vmatprep.subr.mxu0 0.0
    %550 = vmatpush1.msra.mxu0 %v137
    %551 = vmatprep.subr.mxu0 0.0
    %552 = vmatpush1.msra.mxu0 %v136
    %553 = vmatprep.subr.mxu0 0.0
    %554 = vmatpush1.msra.mxu0 %v135
    %555 = vmatprep.subr.mxu0 0.0
    %556 = vmatpush1.msra.mxu0 %v134
    %557 = vmatprep.subr.mxu0 0.0
    %558 = vmatpush1.msra.mxu0 %v133
    %559 = vmatprep.subr.mxu0 0.0
    %560 = vmatpush1.msra.mxu0 %v132
    %561 = vmatprep.subr.mxu0 0.0
    %562 = vmatpush1.msra.mxu0 %v131
    %563 = vmatprep.subr.mxu0 0.0
    %564 = vmatpush2.msra.mxu0 %v162
    %565 = vmatprep.subr.mxu0 0.0
    %566 = vmatpush2.msra.mxu0 %v161
    %567 = vmatprep.subr.mxu0 0.0
    %568 = vmatpush2.msra.mxu0 %v160
    %569 = vmatprep.subr.mxu0 0.0
    %570 = vmatpush2.msra.mxu0 %v159
    %571 = vmatprep.subr.mxu0 0.0
    %572 = vmatpush2.msra.mxu0 %v158
    %573 = vmatprep.subr.mxu0 0.0
    %574 = vmatpush2.msra.mxu0 %v157
    %575 = vmatprep.subr.mxu0 0.0
    %576 = vmatpush2.msra.mxu0 %v156
    %577 = vmatprep.subr.mxu0 0.0
    %578 = vmatpush2.msra.mxu0 %v155
    %579 = vmatprep.subr.mxu0 0.0
    %580 = vmatpush2.msra.mxu0 %v154
    %581 = vmatprep.subr.mxu0 0.0
    %582 = vmatpush2.msra.mxu0 %v153
    %583 = vmatprep.subr.mxu0 0.0
    %584 = vmatpush2.msra.mxu0 %v152
    %585 = vmatprep.subr.mxu0 0.0
    %586 = vmatpush2.msra.mxu0 %v151
    %587 = vmatprep.subr.mxu0 0.0
    %588 = vmatpush2.msra.mxu0 %v150
    %589 = vmatprep.subr.mxu0 0.0
    %590 = vmatpush2.msra.mxu0 %v149
    %591 = vmatprep.subr.mxu0 0.0
    %592 = vmatpush2.msra.mxu0 %v148
    %593 = vmatprep.subr.mxu0 0.0
    %594 = vmatpush2.msra.mxu0 %v147
    %595 = vmatprep.mubr.f32.mxu0 %v458
    %596 = vmatmul.mubr.f32.gmra.mxu0 %v530
    %v597 = vpop.f32.mrf.mxu0
    %v598 = vadd.f32 %v168, %v597
    %v599 = vpop.f32.mrf.mxu0
    %600 = vdwg.mxu0
    %v601 = vtanh.pop %v598
    %602 = vmatprep.subr.mxu0 0.0
    %603 = vmatpush1.msra.mxu0 %v130
    %604 = vmatprep.subr.mxu0 0.0
    %605 = vmatpush1.msra.mxu0 %v129
    %606 = vmatprep.subr.mxu0 0.0
    %607 = vmatpush1.msra.mxu0 %v128
    %608 = vmatprep.subr.mxu0 0.0
    %609 = vmatpush1.msra.mxu0 %v127
    %610 = vmatprep.subr.mxu0 0.0
    %611 = vmatpush1.msra.mxu0 %v126
    %612 = vmatprep.subr.mxu0 0.0
    %613 = vmatpush1.msra.mxu0 %v125
    %614 = vmatprep.subr.mxu0 0.0
    %615 = vmatpush1.msra.mxu0 %v124
    %616 = vmatprep.subr.mxu0 0.0
    %617 = vmatpush1.msra.mxu0 %v123
    %618 = vmatprep.subr.mxu0 0.0
    %619 = vmatpush1.msra.mxu0 %v122
    %620 = vmatprep.subr.mxu0 0.0
    %621 = vmatpush1.msra.mxu0 %v121
    %622 = vmatprep.subr.mxu0 0.0
    %623 = vmatpush1.msra.mxu0 %v120
    %624 = vmatprep.subr.mxu0 0.0
    %625 = vmatpush1.msra.mxu0 %v119
    %626 = vmatprep.subr.mxu0 0.0
    %627 = vmatpush1.msra.mxu0 %v118
    %628 = vmatprep.subr.mxu0 0.0
    %629 = vmatpush1.msra.mxu0 %v117
    %630 = vmatprep.subr.mxu0 0.0
    %631 = vmatpush1.msra.mxu0 %v116
    %632 = vmatprep.subr.mxu0 0.0
    %633 = vmatpush1.msra.mxu0 %v115
    %634 = vmatprep.subr.mxu0 0.0
    %635 = vmatpush2.msra.mxu0 0.0
    %636 = vmatprep.subr.mxu0 0.0
    %637 = vmatpush2.msra.mxu0 0.0
    %638 = vmatprep.subr.mxu0 0.0
    %639 = vmatpush2.msra.mxu0 0.0
    %640 = vmatprep.subr.mxu0 0.0
    %641 = vmatpush2.msra.mxu0 0.0
    %642 = vmatprep.subr.mxu0 0.0
    %643 = vmatpush2.msra.mxu0 0.0
    %644 = vmatprep.subr.mxu0 0.0
    %645 = vmatpush2.msra.mxu0 0.0
    %646 = vmatprep.subr.mxu0 0.0
    %647 = vmatpush2.msra.mxu0 0.0
    %648 = vmatprep.subr.mxu0 0.0
    %649 = vmatpush2.msra.mxu0 0.0
    %650 = vmatprep.subr.mxu0 0.0
    %651 = vmatpush2.msra.mxu0 0.0
    %652 = vmatprep.subr.mxu0 0.0
    %653 = vmatpush2.msra.mxu0 0.0
    %654 = vmatprep.subr.mxu0 0.0
    %655 = vmatpush2.msra.mxu0 0.0
    %656 = vmatprep.subr.mxu0 0.0
    %657 = vmatpush2.msra.mxu0 0.0
    %658 = vmatprep.subr.mxu0 0.0
    %659 = vmatpush2.msra.mxu0 0.0
    %660 = vmatprep.subr.mxu0 0.0
    %661 = vmatpush2.msra.mxu0 0.0
    %662 = vmatprep.subr.mxu0 0.0
    %663 = vmatpush2.msra.mxu0 0.0
    %664 = vmatprep.subr.mxu0 0.0
    %665 = vmatpush2.msra.mxu0 0.0
    %666 = vmatprep.mubr.f32.mxu0 0.0
    %667 = vmatmul.mubr.f32.gmra.mxu0 %v530
    %v668 = vpop.f32.mrf.mxu0
    %v669 = vadd.f32 0.0, %v668
    %v670 = vpop.f32.mrf.mxu0
    %671 = vdwg.mxu0
    %v672 = vadd.f32 %v288, %v669
    %v673 = vtanh.pop %v672
    %674 = vmatprep.subr.mxu0 0.0
    %675 = vmatpush1.msra.mxu0 %v146
    %676 = vmatprep.subr.mxu0 0.0
    %677 = vmatpush1.msra.mxu0 %v145
    %678 = vmatprep.subr.mxu0 0.0
    %679 = vmatpush1.msra.mxu0 %v144
    %680 = vmatprep.subr.mxu0 0.0
    %681 = vmatpush1.msra.mxu0 %v143
    %682 = vmatprep.subr.mxu0 0.0
    %683 = vmatpush1.msra.mxu0 %v142
    %684 = vmatprep.subr.mxu0 0.0
    %685 = vmatpush1.msra.mxu0 %v141
    %686 = vmatprep.subr.mxu0 0.0
    %687 = vmatpush1.msra.mxu0 %v140
    %688 = vmatprep.subr.mxu0 0.0
    %689 = vmatpush1.msra.mxu0 %v139
    %690 = vmatprep.subr.mxu0 0.0
    %691 = vmatpush1.msra.mxu0 %v138
    %692 = vmatprep.subr.mxu0 0.0
    %693 = vmatpush1.msra.mxu0 %v137
    %694 = vmatprep.subr.mxu0 0.0
    %695 = vmatpush1.msra.mxu0 %v136
    %696 = vmatprep.subr.mxu0 0.0
    %697 = vmatpush1.msra.mxu0 %v135
    %698 = vmatprep.subr.mxu0 0.0
    %699 = vmatpush1.msra.mxu0 %v134
    %700 = vmatprep.subr.mxu0 0.0
    %701 = vmatpush1.msra.mxu0 %v133
    %702 = vmatprep.subr.mxu0 0.0
    %703 = vmatpush1.msra.mxu0 %v132
    %704 = vmatprep.subr.mxu0 0.0
    %705 = vmatpush1.msra.mxu0 %v131
    %706 = vmatprep.subr.mxu0 0.0
    %707 = vmatpush2.msra.mxu0 %v162
    %708 = vmatprep.subr.mxu0 0.0
    %709 = vmatpush2.msra.mxu0 %v161
    %710 = vmatprep.subr.mxu0 0.0
    %711 = vmatpush2.msra.mxu0 %v160
    %712 = vmatprep.subr.mxu0 0.0
    %713 = vmatpush2.msra.mxu0 %v159
    %714 = vmatprep.subr.mxu0 0.0
    %715 = vmatpush2.msra.mxu0 %v158
    %716 = vmatprep.subr.mxu0 0.0
    %717 = vmatpush2.msra.mxu0 %v157
    %718 = vmatprep.subr.mxu0 0.0
    %719 = vmatpush2.msra.mxu0 %v156
    %720 = vmatprep.subr.mxu0 0.0
    %721 = vmatpush2.msra.mxu0 %v155
    %722 = vmatprep.subr.mxu0 0.0
    %723 = vmatpush2.msra.mxu0 %v154
    %724 = vmatprep.subr.mxu0 0.0
    %725 = vmatpush2.msra.mxu0 %v153
    %726 = vmatprep.subr.mxu0 0.0
    %727 = vmatpush2.msra.mxu0 %v152
    %728 = vmatprep.subr.mxu0 0.0
    %729 = vmatpush2.msra.mxu0 %v151
    %730 = vmatprep.subr.mxu0 0.0
    %731 = vmatpush2.msra.mxu0 %v150
    %732 = vmatprep.subr.mxu0 0.0
    %733 = vmatpush2.msra.mxu0 %v149
    %734 = vmatprep.subr.mxu0 0.0
    %735 = vmatpush2.msra.mxu0 %v148
    %736 = vmatprep.subr.mxu0 0.0
    %737 = vmatpush2.msra.mxu0 %v147
    %738 = vmatprep.mubr.f32.mxu0 %v601
    %739 = vmatmul.mubr.f32.gmra.mxu0 %v673
    %v740 = vpop.f32.mrf.mxu0
    %v741 = vadd.f32 %v168, %v740
    %v742 = vpop.f32.mrf.mxu0
    %743 = vdwg.mxu0
    %v744 = vtanh.pop %v741
    %745 = vmatprep.subr.mxu0 0.0
    %746 = vmatpush1.msra.mxu0 %v130
    %747 = vmatprep.subr.mxu0 0.0
    %748 = vmatpush1.msra.mxu0 %v129
    %749 = vmatprep.subr.mxu0 0.0
    %750 = vmatpush1.msra.mxu0 %v128
    %751 = vmatprep.subr.mxu0 0.0
    %752 = vmatpush1.msra.mxu0 %v127
    %753 = vmatprep.subr.mxu0 0.0
    %754 = vmatpush1.msra.mxu0 %v126
    %755 = vmatprep.subr.mxu0 0.0
    %756 = vmatpush1.msra.mxu0 %v125
    %757 = vmatprep.subr.mxu0 0.0
    %758 = vmatpush1.msra.mxu0 %v124
    %759 = vmatprep.subr.mxu0 0.0
    %760 = vmatpush1.msra.mxu0 %v123
    %761 = vmatprep.subr.mxu0 0.0
    %762 = vmatpush1.msra.mxu0 %v122
    %763 = vmatprep.subr.mxu0 0.0
    %764 = vmatpush1.msra.mxu0 %v121
    %765 = vmatprep.subr.mxu0 0.0
    %766 = vmatpush1.msra.mxu0 %v120
    %767 = vmatprep.subr.mxu0 0.0
    %768 = vmatpush1.msra.mxu0 %v119
    %769 = vmatprep.subr.mxu0 0.0
    %770 = vmatpush1.msra.mxu0 %v118
    %771 = vmatprep.subr.mxu0 0.0
    %772 = vmatpush1.msra.mxu0 %v117
    %773 = vmatprep.subr.mxu0 0.0
    %774 = vmatpush1.msra.mxu0 %v116
    %775 = vmatprep.subr.mxu0 0.0
    %776 = vmatpush1.msra.mxu0 %v115
    %777 = vmatprep.subr.mxu0 0.0
    %778 = vmatpush2.msra.mxu0 0.0
    %779 = vmatprep.subr.mxu0 0.0
    %780 = vmatpush2.msra.mxu0 0.0
    %781 = vmatprep.subr.mxu0 0.0
    %782 = vmatpush2.msra.mxu0 0.0
    %783 = vmatprep.subr.mxu0 0.0
    %784 = vmatpush2.msra.mxu0 0.0
    %785 = vmatprep.subr.mxu0 0.0
    %786 = vmatpush2.msra.mxu0 0.0
    %787 = vmatprep.subr.mxu0 0.0
    %788 = vmatpush2.msra.mxu0 0.0
    %789 = vmatprep.subr.mxu0 0.0
    %790 = vmatpush2.msra.mxu0 0.0
    %791 = vmatprep.subr.mxu0 0.0
    %792 = vmatpush2.msra.mxu0 0.0
    %793 = vmatprep.subr.mxu0 0.0
    %794 = vmatpush2.msra.mxu0 0.0
    %795 = vmatprep.subr.mxu0 0.0
    %796 = vmatpush2.msra.mxu0 0.0
    %797 = vmatprep.subr.mxu0 0.0
    %798 = vmatpush2.msra.mxu0 0.0
    %799 = vmatprep.subr.mxu0 0.0
    %800 = vmatpush2.msra.mxu0 0.0
    %801 = vmatprep.subr.mxu0 0.0
    %802 = vmatpush2.msra.mxu0 0.0
    %803 = vmatprep.subr.mxu0 0.0
    %804 = vmatpush2.msra.mxu0 0.0
    %805 = vmatprep.subr.mxu0 0.0
    %806 = vmatpush2.msra.mxu0 0.0
    %807 = vmatprep.subr.mxu0 0.0
    %808 = vmatpush2.msra.mxu0 0.0
    %809 = vmatprep.mubr.f32.mxu0 0.0
    %810 = vmatmul.mubr.f32.gmra.mxu0 %v673
    %v811 = vpop.f32.mrf.mxu0
    %v812 = vadd.f32 0.0, %v811
    %v813 = vpop.f32.mrf.mxu0
    %814 = vdwg.mxu0
    %v815 = vadd.f32 %v293, %v812
    %v816 = vtanh.pop %v815
    %817 = vmatprep.subr.mxu0 0.0
    %818 = vmatpush1.msra.mxu0 %v146
    %819 = vmatprep.subr.mxu0 0.0
    %820 = vmatpush1.msra.mxu0 %v145
    %821 = vmatprep.subr.mxu0 0.0
    %822 = vmatpush1.msra.mxu0 %v144
    %823 = vmatprep.subr.mxu0 0.0
    %824 = vmatpush1.msra.mxu0 %v143
    %825 = vmatprep.subr.mxu0 0.0
    %826 = vmatpush1.msra.mxu0 %v142
    %827 = vmatprep.subr.mxu0 0.0
    %828 = vmatpush1.msra.mxu0 %v141
    %829 = vmatprep.subr.mxu0 0.0
    %830 = vmatpush1.msra.mxu0 %v140
    %831 = vmatprep.subr.mxu0 0.0
    %832 = vmatpush1.msra.mxu0 %v139
    %833 = vmatprep.subr.mxu0 0.0
    %834 = vmatpush1.msra.mxu0 %v138
    %835 = vmatprep.subr.mxu0 0.0
    %836 = vmatpush1.msra.mxu0 %v137
    %837 = vmatprep.subr.mxu0 0.0
    %838 = vmatpush1.msra.mxu0 %v136
    %839 = vmatprep.subr.mxu0 0.0
    %840 = vmatpush1.msra.mxu0 %v135
    %841 = vmatprep.subr.mxu0 0.0
    %842 = vmatpush1.msra.mxu0 %v134
    %843 = vmatprep.subr.mxu0 0.0
    %844 = vmatpush1.msra.mxu0 %v133
    %845 = vmatprep.subr.mxu0 0.0
    %846 = vmatpush1.msra.mxu0 %v132
    %847 = vmatprep.subr.mxu0 0.0
    %848 = vmatpush1.msra.mxu0 %v131
    %849 = vmatprep.subr.mxu0 0.0
    %850 = vmatpush2.msra.mxu0 %v162
    %851 = vmatprep.subr.mxu0 0.0
    %852 = vmatpush2.msra.mxu0 %v161
    %853 = vmatprep.subr.mxu0 0.0
    %854 = vmatpush2.msra.mxu0 %v160
    %855 = vmatprep.subr.mxu0 0.0
    %856 = vmatpush2.msra.mxu0 %v159
    %857 = vmatprep.subr.mxu0 0.0
    %858 = vmatpush2.msra.mxu0 %v158
    %859 = vmatprep.subr.mxu0 0.0
    %860 = vmatpush2.msra.mxu0 %v157
    %861 = vmatprep.subr.mxu0 0.0
    %862 = vmatpush2.msra.mxu0 %v156
    %863 = vmatprep.subr.mxu0 0.0
    %864 = vmatpush2.msra.mxu0 %v155
    %865 = vmatprep.subr.mxu0 0.0
    %866 = vmatpush2.msra.mxu0 %v154
    %867 = vmatprep.subr.mxu0 0.0
    %868 = vmatpush2.msra.mxu0 %v153
    %869 = vmatprep.subr.mxu0 0.0
    %870 = vmatpush2.msra.mxu0 %v152
    %871 = vmatprep.subr.mxu0 0.0
    %872 = vmatpush2.msra.mxu0 %v151
    %873 = vmatprep.subr.mxu0 0.0
    %874 = vmatpush2.msra.mxu0 %v150
    %875 = vmatprep.subr.mxu0 0.0
    %876 = vmatpush2.msra.mxu0 %v149
    %877 = vmatprep.subr.mxu0 0.0
    %878 = vmatpush2.msra.mxu0 %v148
    %879 = vmatprep.subr.mxu0 0.0
    %880 = vmatpush2.msra.mxu0 %v147
    %881 = vmatprep.mubr.f32.mxu0 %v744
    %882 = vmatmul.mubr.f32.gmra.mxu0 %v816
    %v883 = vpop.f32.mrf.mxu0
    %v884 = vadd.f32 %v168, %v883
    %v885 = vpop.f32.mrf.mxu0
    %886 = vdwg.mxu0
    %v887 = vtanh.pop %v884
    %888 = vmatprep.subr.mxu0 0.0
    %889 = vmatpush1.msra.mxu0 %v130
    %890 = vmatprep.subr.mxu0 0.0
    %891 = vmatpush1.msra.mxu0 %v129
    %892 = vmatprep.subr.mxu0 0.0
    %893 = vmatpush1.msra.mxu0 %v128
    %894 = vmatprep.subr.mxu0 0.0
    %895 = vmatpush1.msra.mxu0 %v127
    %896 = vmatprep.subr.mxu0 0.0
    %897 = vmatpush1.msra.mxu0 %v126
    %898 = vmatprep.subr.mxu0 0.0
    %899 = vmatpush1.msra.mxu0 %v125
    %900 = vmatprep.subr.mxu0 0.0
    %901 = vmatpush1.msra.mxu0 %v124
    %902 = vmatprep.subr.mxu0 0.0
    %903 = vmatpush1.msra.mxu0 %v123
    %904 = vmatprep.subr.mxu0 0.0
    %905 = vmatpush1.msra.mxu0 %v122
    %906 = vmatprep.subr.mxu0 0.0
    %907 = vmatpush1.msra.mxu0 %v121
    %908 = vmatprep.subr.mxu0 0.0
    %909 = vmatpush1.msra.mxu0 %v120
    %910 = vmatprep.subr.mxu0 0.0
    %911 = vmatpush1.msra.mxu0 %v119
    %912 = vmatprep.subr.mxu0 0.0
    %913 = vmatpush1.msra.mxu0 %v118
    %914 = vmatprep.subr.mxu0 0.0
    %915 = vmatpush1.msra.mxu0 %v117
    %916 = vmatprep.subr.mxu0 0.0
    %917 = vmatpush1.msra.mxu0 %v116
    %918 = vmatprep.subr.mxu0 0.0
    %919 = vmatpush1.msra.mxu0 %v115
    %920 = vmatprep.subr.mxu0 0.0
    %921 = vmatpush2.msra.mxu0 0.0
    %922 = vmatprep.subr.mxu0 0.0
    %923 = vmatpush2.msra.mxu0 0.0
    %924 = vmatprep.subr.mxu0 0.0
    %925 = vmatpush2.msra.mxu0 0.0
    %926 = vmatprep.subr.mxu0 0.0
    %927 = vmatpush2.msra.mxu0 0.0
    %928 = vmatprep.subr.mxu0 0.0
    %929 = vmatpush2.msra.mxu0 0.0
    %930 = vmatprep.subr.mxu0 0.0
    %931 = vmatpush2.msra.mxu0 0.0
    %932 = vmatprep.subr.mxu0 0.0
    %933 = vmatpush2.msra.mxu0 0.0
    %934 = vmatprep.subr.mxu0 0.0
    %935 = vmatpush2.msra.mxu0 0.0
    %936 = vmatprep.subr.mxu0 0.0
    %937 = vmatpush2.msra.mxu0 0.0
    %938 = vmatprep.subr.mxu0 0.0
    %939 = vmatpush2.msra.mxu0 0.0
    %940 = vmatprep.subr.mxu0 0.0
    %941 = vmatpush2.msra.mxu0 0.0
    %942 = vmatprep.subr.mxu0 0.0
    %943 = vmatpush2.msra.mxu0 0.0
    %944 = vmatprep.subr.mxu0 0.0
    %945 = vmatpush2.msra.mxu0 0.0
    %946 = vmatprep.subr.mxu0 0.0
    %947 = vmatpush2.msra.mxu0 0.0
    %948 = vmatprep.subr.mxu0 0.0
    %949 = vmatpush2.msra.mxu0 0.0
    %950 = vmatprep.subr.mxu0 0.0
    %951 = vmatpush2.msra.mxu0 0.0
    %952 = vmatprep.mubr.f32.mxu0 0.0
    %953 = vmatmul.mubr.f32.gmra.mxu0 %v816
    %v954 = vpop.f32.mrf.mxu0
    %v955 = vadd.f32 0.0, %v954
    %v956 = vpop.f32.mrf.mxu0
    %957 = vdwg.mxu0
    %v958 = vadd.f32 %v298, %v955
    %v959 = vtanh.pop %v958
    %960 = vmatprep.subr.mxu0 0.0
    %961 = vmatpush1.msra.mxu0 %v146
    %962 = vmatprep.subr.mxu0 0.0
    %963 = vmatpush1.msra.mxu0 %v145
    %964 = vmatprep.subr.mxu0 0.0
    %965 = vmatpush1.msra.mxu0 %v144
    %966 = vmatprep.subr.mxu0 0.0
    %967 = vmatpush1.msra.mxu0 %v143
    %968 = vmatprep.subr.mxu0 0.0
    %969 = vmatpush1.msra.mxu0 %v142
    %970 = vmatprep.subr.mxu0 0.0
    %971 = vmatpush1.msra.mxu0 %v141
    %972 = vmatprep.subr.mxu0 0.0
    %973 = vmatpush1.msra.mxu0 %v140
    %974 = vmatprep.subr.mxu0 0.0
    %975 = vmatpush1.msra.mxu0 %v139
    %976 = vmatprep.subr.mxu0 0.0
    %977 = vmatpush1.msra.mxu0 %v138
    %978 = vmatprep.subr.mxu0 0.0
    %979 = vmatpush1.msra.mxu0 %v137
    %980 = vmatprep.subr.mxu0 0.0
    %981 = vmatpush1.msra.mxu0 %v136
    %982 = vmatprep.subr.mxu0 0.0
    %983 = vmatpush1.msra.mxu0 %v135
    %984 = vmatprep.subr.mxu0 0.0
    %985 = vmatpush1.msra.mxu0 %v134
    %986 = vmatprep.subr.mxu0 0.0
    %987 = vmatpush1.msra.mxu0 %v133
    %988 = vmatprep.subr.mxu0 0.0
    %989 = vmatpush1.msra.mxu0 %v132
    %990 = vmatprep.subr.mxu0 0.0
    %991 = vmatpush1.msra.mxu0 %v131
    %992 = vmatprep.subr.mxu0 0.0
    %993 = vmatpush2.msra.mxu0 %v162
    %994 = vmatprep.subr.mxu0 0.0
    %995 = vmatpush2.msra.mxu0 %v161
    %996 = vmatprep.subr.mxu0 0.0
    %997 = vmatpush2.msra.mxu0 %v160
    %998 = vmatprep.subr.mxu0 0.0
    %999 = vmatpush2.msra.mxu0 %v159
    %1000 = vmatprep.subr.mxu0 0.0
    %1001 = vmatpush2.msra.mxu0 %v158
    %1002 = vmatprep.subr.mxu0 0.0
    %1003 = vmatpush2.msra.mxu0 %v157
    %1004 = vmatprep.subr.mxu0 0.0
    %1005 = vmatpush2.msra.mxu0 %v156
    %1006 = vmatprep.subr.mxu0 0.0
    %1007 = vmatpush2.msra.mxu0 %v155
    %1008 = vmatprep.subr.mxu0 0.0
    %1009 = vmatpush2.msra.mxu0 %v154
    %1010 = vmatprep.subr.mxu0 0.0
    %1011 = vmatpush2.msra.mxu0 %v153
    %1012 = vmatprep.subr.mxu0 0.0
    %1013 = vmatpush2.msra.mxu0 %v152
    %1014 = vmatprep.subr.mxu0 0.0
    %1015 = vmatpush2.msra.mxu0 %v151
    %1016 = vmatprep.subr.mxu0 0.0
    %1017 = vmatpush2.msra.mxu0 %v150
    %1018 = vmatprep.subr.mxu0 0.0
    %1019 = vmatpush2.msra.mxu0 %v149
    %1020 = vmatprep.subr.mxu0 0.0
    %1021 = vmatpush2.msra.mxu0 %v148
    %1022 = vmatprep.subr.mxu0 0.0
    %1023 = vmatpush2.msra.mxu0 %v147
    %1024 = vmatprep.mubr.f32.mxu0 %v887
    %1025 = vmatmul.mubr.f32.gmra.mxu0 %v959
    %v1026 = vpop.f32.mrf.mxu0
    %v1027 = vadd.f32 %v168, %v1026
    %v1028 = vpop.f32.mrf.mxu0
    %1029 = vdwg.mxu0
    %v1030 = vtanh.pop %v1027
    %1031 = vmatprep.subr.mxu0 0.0
    %1032 = vmatpush1.msra.mxu0 %v130
    %1033 = vmatprep.subr.mxu0 0.0
    %1034 = vmatpush1.msra.mxu0 %v129
    %1035 = vmatprep.subr.mxu0 0.0
    %1036 = vmatpush1.msra.mxu0 %v128
    %1037 = vmatprep.subr.mxu0 0.0
    %1038 = vmatpush1.msra.mxu0 %v127
    %1039 = vmatprep.subr.mxu0 0.0
    %1040 = vmatpush1.msra.mxu0 %v126
    %1041 = vmatprep.subr.mxu0 0.0
    %1042 = vmatpush1.msra.mxu0 %v125
    %1043 = vmatprep.subr.mxu0 0.0
    %1044 = vmatpush1.msra.mxu0 %v124
    %1045 = vmatprep.subr.mxu0 0.0
    %1046 = vmatpush1.msra.mxu0 %v123
    %1047 = vmatprep.subr.mxu0 0.0
    %1048 = vmatpush1.msra.mxu0 %v122
    %1049 = vmatprep.subr.mxu0 0.0
    %1050 = vmatpush1.msra.mxu0 %v121
    %1051 = vmatprep.subr.mxu0 0.0
    %1052 = vmatpush1.msra.mxu0 %v120
    %1053 = vmatprep.subr.mxu0 0.0
    %1054 = vmatpush1.msra.mxu0 %v119
    %1055 = vmatprep.subr.mxu0 0.0
    %1056 = vmatpush1.msra.mxu0 %v118
    %1057 = vmatprep.subr.mxu0 0.0
    %1058 = vmatpush1.msra.mxu0 %v117
    %1059 = vmatprep.subr.mxu0 0.0
    %1060 = vmatpush1.msra.mxu0 %v116
    %1061 = vmatprep.subr.mxu0 0.0
    %1062 = vmatpush1.msra.mxu0 %v115
    %1063 = vmatprep.subr.mxu0 0.0
    %1064 = vmatpush2.msra.mxu0 0.0
    %1065 = vmatprep.subr.mxu0 0.0
    %1066 = vmatpush2.msra.mxu0 0.0
    %1067 = vmatprep.subr.mxu0 0.0
    %1068 = vmatpush2.msra.mxu0 0.0
    %1069 = vmatprep.subr.mxu0 0.0
    %1070 = vmatpush2.msra.mxu0 0.0
    %1071 = vmatprep.subr.mxu0 0.0
    %1072 = vmatpush2.msra.mxu0 0.0
    %1073 = vmatprep.subr.mxu0 0.0
    %1074 = vmatpush2.msra.mxu0 0.0
    %1075 = vmatprep.subr.mxu0 0.0
    %1076 = vmatpush2.msra.mxu0 0.0
    %1077 = vmatprep.subr.mxu0 0.0
    %1078 = vmatpush2.msra.mxu0 0.0
    %1079 = vmatprep.subr.mxu0 0.0
    %1080 = vmatpush2.msra.mxu0 0.0
    %1081 = vmatprep.subr.mxu0 0.0
    %1082 = vmatpush2.msra.mxu0 0.0
    %1083 = vmatprep.subr.mxu0 0.0
    %1084 = vmatpush2.msra.mxu0 0.0
    %1085 = vmatprep.subr.mxu0 0.0
    %1086 = vmatpush2.msra.mxu0 0.0
    %1087 = vmatprep.subr.mxu0 0.0
    %1088 = vmatpush2.msra.mxu0 0.0
    %1089 = vmatprep.subr.mxu0 0.0
    %1090 = vmatpush2.msra.mxu0 0.0
    %1091 = vmatprep.subr.mxu0 0.0
    %1092 = vmatpush2.msra.mxu0 0.0
    %1093 = vmatprep.subr.mxu0 0.0
    %1094 = vmatpush2.msra.mxu0 0.0
    %1095 = vmatprep.mubr.f32.mxu0 0.0
    %1096 = vmatmul.mubr.f32.gmra.mxu0 %v959
    %v1097 = vpop.f32.mrf.mxu0
    %v1098 = vadd.f32 0.0, %v1097
    %v1099 = vpop.f32.mrf.mxu0
    %1100 = vdwg.mxu0
    %v1101 = vadd.f32 %v303, %v1098
    %v1102 = vtanh.pop %v1101
    %1103 = vmatprep.subr.mxu0 0.0
    %1104 = vmatpush1.msra.mxu0 %v146
    %1105 = vmatprep.subr.mxu0 0.0
    %1106 = vmatpush1.msra.mxu0 %v145
    %1107 = vmatprep.subr.mxu0 0.0
    %1108 = vmatpush1.msra.mxu0 %v144
    %1109 = vmatprep.subr.mxu0 0.0
    %1110 = vmatpush1.msra.mxu0 %v143
    %1111 = vmatprep.subr.mxu0 0.0
    %1112 = vmatpush1.msra.mxu0 %v142
    %1113 = vmatprep.subr.mxu0 0.0
    %1114 = vmatpush1.msra.mxu0 %v141
    %1115 = vmatprep.subr.mxu0 0.0
    %1116 = vmatpush1.msra.mxu0 %v140
    %1117 = vmatprep.subr.mxu0 0.0
    %1118 = vmatpush1.msra.mxu0 %v139
    %1119 = vmatprep.subr.mxu0 0.0
    %1120 = vmatpush1.msra.mxu0 %v138
    %1121 = vmatprep.subr.mxu0 0.0
    %1122 = vmatpush1.msra.mxu0 %v137
    %1123 = vmatprep.subr.mxu0 0.0
    %1124 = vmatpush1.msra.mxu0 %v136
    %1125 = vmatprep.subr.mxu0 0.0
    %1126 = vmatpush1.msra.mxu0 %v135
    %1127 = vmatprep.subr.mxu0 0.0
    %1128 = vmatpush1.msra.mxu0 %v134
    %1129 = vmatprep.subr.mxu0 0.0
    %1130 = vmatpush1.msra.mxu0 %v133
    %1131 = vmatprep.subr.mxu0 0.0
    %1132 = vmatpush1.msra.mxu0 %v132
    %1133 = vmatprep.subr.mxu0 0.0
    %1134 = vmatpush1.msra.mxu0 %v131
    %1135 = vmatprep.subr.mxu0 0.0
    %1136 = vmatpush2.msra.mxu0 %v162
    %1137 = vmatprep.subr.mxu0 0.0
    %1138 = vmatpush2.msra.mxu0 %v161
    %1139 = vmatprep.subr.mxu0 0.0
    %1140 = vmatpush2.msra.mxu0 %v160
    %1141 = vmatprep.subr.mxu0 0.0
    %1142 = vmatpush2.msra.mxu0 %v159
    %1143 = vmatprep.subr.mxu0 0.0
    %1144 = vmatpush2.msra.mxu0 %v158
    %1145 = vmatprep.subr.mxu0 0.0
    %1146 = vmatpush2.msra.mxu0 %v157
    %1147 = vmatprep.subr.mxu0 0.0
    %1148 = vmatpush2.msra.mxu0 %v156
    %1149 = vmatprep.subr.mxu0 0.0
    %1150 = vmatpush2.msra.mxu0 %v155
    %1151 = vmatprep.subr.mxu0 0.0
    %1152 = vmatpush2.msra.mxu0 %v154
    %1153 = vmatprep.subr.mxu0 0.0
    %1154 = vmatpush2.msra.mxu0 %v153
    %1155 = vmatprep.subr.mxu0 0.0
    %1156 = vmatpush2.msra.mxu0 %v152
    %1157 = vmatprep.subr.mxu0 0.0
    %1158 = vmatpush2.msra.mxu0 %v151
    %1159 = vmatprep.subr.mxu0 0.0
    %1160 = vmatpush2.msra.mxu0 %v150
    %1161 = vmatprep.subr.mxu0 0.0
    %1162 = vmatpush2.msra.mxu0 %v149
    %1163 = vmatprep.subr.mxu0 0.0
    %1164 = vmatpush2.msra.mxu0 %v148
    %1165 = vmatprep.subr.mxu0 0.0
    %1166 = vmatpush2.msra.mxu0 %v147
    %1167 = vmatprep.mubr.f32.mxu0 %v1030
    %1168 = vmatmul.mubr.f32.gmra.mxu0 %v1102
    %v1169 = vpop.f32.mrf.mxu0
    %v1170 = vadd.f32 %v168, %v1169
    %v1171 = vpop.f32.mrf.mxu0
    %1172 = vdwg.mxu0
    %v1173 = vtanh.pop %v1170
    %1174 = vmatprep.subr.mxu0 0.0
    %1175 = vmatpush1.msra.mxu0 %v130
    %1176 = vmatprep.subr.mxu0 0.0
    %1177 = vmatpush1.msra.mxu0 %v129
    %1178 = vmatprep.subr.mxu0 0.0
    %1179 = vmatpush1.msra.mxu0 %v128
    %1180 = vmatprep.subr.mxu0 0.0
    %1181 = vmatpush1.msra.mxu0 %v127
    %1182 = vmatprep.subr.mxu0 0.0
    %1183 = vmatpush1.msra.mxu0 %v126
    %1184 = vmatprep.subr.mxu0 0.0
    %1185 = vmatpush1.msra.mxu0 %v125
    %1186 = vmatprep.subr.mxu0 0.0
    %1187 = vmatpush1.msra.mxu0 %v124
    %1188 = vmatprep.subr.mxu0 0.0
    %1189 = vmatpush1.msra.mxu0 %v123
    %1190 = vmatprep.subr.mxu0 0.0
    %1191 = vmatpush1.msra.mxu0 %v122
    %1192 = vmatprep.subr.mxu0 0.0
    %1193 = vmatpush1.msra.mxu0 %v121
    %1194 = vmatprep.subr.mxu0 0.0
    %1195 = vmatpush1.msra.mxu0 %v120
    %1196 = vmatprep.subr.mxu0 0.0
    %1197 = vmatpush1.msra.mxu0 %v119
    %1198 = vmatprep.subr.mxu0 0.0
    %1199 = vmatpush1.msra.mxu0 %v118
    %1200 = vmatprep.subr.mxu0 0.0
    %1201 = vmatpush1.msra.mxu0 %v117
    %1202 = vmatprep.subr.mxu0 0.0
    %1203 = vmatpush1.msra.mxu0 %v116
    %1204 = vmatprep.subr.mxu0 0.0
    %1205 = vmatpush1.msra.mxu0 %v115
    %1206 = vmatprep.subr.mxu0 0.0
    %1207 = vmatpush2.msra.mxu0 0.0
    %1208 = vmatprep.subr.mxu0 0.0
    %1209 = vmatpush2.msra.mxu0 0.0
    %1210 = vmatprep.subr.mxu0 0.0
    %1211 = vmatpush2.msra.mxu0 0.0
    %1212 = vmatprep.subr.mxu0 0.0
    %1213 = vmatpush2.msra.mxu0 0.0
    %1214 = vmatprep.subr.mxu0 0.0
    %1215 = vmatpush2.msra.mxu0 0.0
    %1216 = vmatprep.subr.mxu0 0.0
    %1217 = vmatpush2.msra.mxu0 0.0
    %1218 = vmatprep.subr.mxu0 0.0
    %1219 = vmatpush2.msra.mxu0 0.0
    %1220 = vmatprep.subr.mxu0 0.0
    %1221 = vmatpush2.msra.mxu0 0.0
    %1222 = vmatprep.subr.mxu0 0.0
    %1223 = vmatpush2.msra.mxu0 0.0
    %1224 = vmatprep.subr.mxu0 0.0
    %1225 = vmatpush2.msra.mxu0 0.0
    %1226 = vmatprep.subr.mxu0 0.0
    %1227 = vmatpush2.msra.mxu0 0.0
    %1228 = vmatprep.subr.mxu0 0.0
    %1229 = vmatpush2.msra.mxu0 0.0
    %1230 = vmatprep.subr.mxu0 0.0
    %1231 = vmatpush2.msra.mxu0 0.0
    %1232 = vmatprep.subr.mxu0 0.0
    %1233 = vmatpush2.msra.mxu0 0.0
    %1234 = vmatprep.subr.mxu0 0.0
    %1235 = vmatpush2.msra.mxu0 0.0
    %1236 = vmatprep.subr.mxu0 0.0
    %1237 = vmatpush2.msra.mxu0 0.0
    %1238 = vmatprep.mubr.f32.mxu0 0.0
    %1239 = vmatmul.mubr.f32.gmra.mxu0 %v1102
    %v1240 = vpop.f32.mrf.mxu0
    %v1241 = vadd.f32 0.0, %v1240
    %v1242 = vpop.f32.mrf.mxu0
    %1243 = vdwg.mxu0
    %v1244 = vadd.f32 %v308, %v1241
    %v1245 = vtanh.pop %v1244
    %1246 = vmatprep.subr.mxu0 0.0
    %1247 = vmatpush1.msra.mxu0 %v146
    %1248 = vmatprep.subr.mxu0 0.0
    %1249 = vmatpush1.msra.mxu0 %v145
    %1250 = vmatprep.subr.mxu0 0.0
    %1251 = vmatpush1.msra.mxu0 %v144
    %1252 = vmatprep.subr.mxu0 0.0
    %1253 = vmatpush1.msra.mxu0 %v143
    %1254 = vmatprep.subr.mxu0 0.0
    %1255 = vmatpush1.msra.mxu0 %v142
    %1256 = vmatprep.subr.mxu0 0.0
    %1257 = vmatpush1.msra.mxu0 %v141
    %1258 = vmatprep.subr.mxu0 0.0
    %1259 = vmatpush1.msra.mxu0 %v140
    %1260 = vmatprep.subr.mxu0 0.0
    %1261 = vmatpush1.msra.mxu0 %v139
    %1262 = vmatprep.subr.mxu0 0.0
    %1263 = vmatpush1.msra.mxu0 %v138
    %1264 = vmatprep.subr.mxu0 0.0
    %1265 = vmatpush1.msra.mxu0 %v137
    %1266 = vmatprep.subr.mxu0 0.0
    %1267 = vmatpush1.msra.mxu0 %v136
    %1268 = vmatprep.subr.mxu0 0.0
    %1269 = vmatpush1.msra.mxu0 %v135
    %1270 = vmatprep.subr.mxu0 0.0
    %1271 = vmatpush1.msra.mxu0 %v134
    %1272 = vmatprep.subr.mxu0 0.0
    %1273 = vmatpush1.msra.mxu0 %v133
    %1274 = vmatprep.subr.mxu0 0.0
    %1275 = vmatpush1.msra.mxu0 %v132
    %1276 = vmatprep.subr.mxu0 0.0
    %1277 = vmatpush1.msra.mxu0 %v131
    %1278 = vmatprep.subr.mxu0 0.0
    %1279 = vmatpush2.msra.mxu0 %v162
    %1280 = vmatprep.subr.mxu0 0.0
    %1281 = vmatpush2.msra.mxu0 %v161
    %1282 = vmatprep.subr.mxu0 0.0
    %1283 = vmatpush2.msra.mxu0 %v160
    %1284 = vmatprep.subr.mxu0 0.0
    %1285 = vmatpush2.msra.mxu0 %v159
    %1286 = vmatprep.subr.mxu0 0.0
    %1287 = vmatpush2.msra.mxu0 %v158
    %1288 = vmatprep.subr.mxu0 0.0
    %1289 = vmatpush2.msra.mxu0 %v157
    %1290 = vmatprep.subr.mxu0 0.0
    %1291 = vmatpush2.msra.mxu0 %v156
    %1292 = vmatprep.subr.mxu0 0.0
    %1293 = vmatpush2.msra.mxu0 %v155
    %1294 = vmatprep.subr.mxu0 0.0
    %1295 = vmatpush2.msra.mxu0 %v154
    %1296 = vmatprep.subr.mxu0 0.0
    %1297 = vmatpush2.msra.mxu0 %v153
    %1298 = vmatprep.subr.mxu0 0.0
    %1299 = vmatpush2.msra.mxu0 %v152
    %1300 = vmatprep.subr.mxu0 0.0
    %1301 = vmatpush2.msra.mxu0 %v151
    %1302 = vmatprep.subr.mxu0 0.0
    %1303 = vmatpush2.msra.mxu0 %v150
    %1304 = vmatprep.subr.mxu0 0.0
    %1305 = vmatpush2.msra.mxu0 %v149
    %1306 = vmatprep.subr.mxu0 0.0
    %1307 = vmatpush2.msra.mxu0 %v148
    %1308 = vmatprep.subr.mxu0 0.0
    %1309 = vmatpush2.msra.mxu0 %v147
    %1310 = vmatprep.mubr.f32.mxu0 %v1173
    %1311 = vmatmul.mubr.f32.gmra.mxu0 %v1245
    %v1312 = vpop.f32.mrf.mxu0
    %v1313 = vadd.f32 %v168, %v1312
    %v1314 = vpop.f32.mrf.mxu0
    %1315 = vdwg.mxu0
    %v1316 = vtanh.pop %v1313
    %1317 = vmatprep.subr.mxu0 0.0
    %1318 = vmatpush1.msra.mxu0 %v130
    %1319 = vmatprep.subr.mxu0 0.0
    %1320 = vmatpush1.msra.mxu0 %v129
    %1321 = vmatprep.subr.mxu0 0.0
    %1322 = vmatpush1.msra.mxu0 %v128
    %1323 = vmatprep.subr.mxu0 0.0
    %1324 = vmatpush1.msra.mxu0 %v127
    %1325 = vmatprep.subr.mxu0 0.0
    %1326 = vmatpush1.msra.mxu0 %v126
    %1327 = vmatprep.subr.mxu0 0.0
    %1328 = vmatpush1.msra.mxu0 %v125
    %1329 = vmatprep.subr.mxu0 0.0
    %1330 = vmatpush1.msra.mxu0 %v124
    %1331 = vmatprep.subr.mxu0 0.0
    %1332 = vmatpush1.msra.mxu0 %v123
    %1333 = vmatprep.subr.mxu0 0.0
    %1334 = vmatpush1.msra.mxu0 %v122
    %1335 = vmatprep.subr.mxu0 0.0
    %1336 = vmatpush1.msra.mxu0 %v121
    %1337 = vmatprep.subr.mxu0 0.0
    %1338 = vmatpush1.msra.mxu0 %v120
    %1339 = vmatprep.subr.mxu0 0.0
    %1340 = vmatpush1.msra.mxu0 %v119
    %1341 = vmatprep.subr.mxu0 0.0
    %1342 = vmatpush1.msra.mxu0 %v118
    %1343 = vmatprep.subr.mxu0 0.0
    %1344 = vmatpush1.msra.mxu0 %v117
    %1345 = vmatprep.subr.mxu0 0.0
    %1346 = vmatpush1.msra.mxu0 %v116
    %1347 = vmatprep.subr.mxu0 0.0
    %1348 = vmatpush1.msra.mxu0 %v115
    %1349 = vmatprep.subr.mxu0 0.0
    %1350 = vmatpush2.msra.mxu0 0.0
    %1351 = vmatprep.subr.mxu0 0.0
    %1352 = vmatpush2.msra.mxu0 0.0
    %1353 = vmatprep.subr.mxu0 0.0
    %1354 = vmatpush2.msra.mxu0 0.0
    %1355 = vmatprep.subr.mxu0 0.0
    %1356 = vmatpush2.msra.mxu0 0.0
    %1357 = vmatprep.subr.mxu0 0.0
    %1358 = vmatpush2.msra.mxu0 0.0
    %1359 = vmatprep.subr.mxu0 0.0
    %1360 = vmatpush2.msra.mxu0 0.0
    %1361 = vmatprep.subr.mxu0 0.0
    %1362 = vmatpush2.msra.mxu0 0.0
    %1363 = vmatprep.subr.mxu0 0.0
    %1364 = vmatpush2.msra.mxu0 0.0
    %1365 = vmatprep.subr.mxu0 0.0
    %1366 = vmatpush2.msra.mxu0 0.0
    %1367 = vmatprep.subr.mxu0 0.0
    %1368 = vmatpush2.msra.mxu0 0.0
    %1369 = vmatprep.subr.mxu0 0.0
    %1370 = vmatpush2.msra.mxu0 0.0
    %1371 = vmatprep.subr.mxu0 0.0
    %1372 = vmatpush2.msra.mxu0 0.0
    %1373 = vmatprep.subr.mxu0 0.0
    %1374 = vmatpush2.msra.mxu0 0.0
    %1375 = vmatprep.subr.mxu0 0.0
    %1376 = vmatpush2.msra.mxu0 0.0
    %1377 = vmatprep.subr.mxu0 0.0
    %1378 = vmatpush2.msra.mxu0 0.0
    %1379 = vmatprep.subr.mxu0 0.0
    %1380 = vmatpush2.msra.mxu0 0.0
    %1381 = vmatprep.mubr.f32.mxu0 0.0
    %1382 = vmatmul.mubr.f32.gmra.mxu0 %v1245
    %v1383 = vpop.f32.mrf.mxu0
    %v1384 = vadd.f32 0.0, %v1383
    %v1385 = vpop.f32.mrf.mxu0
    %1386 = vdwg.mxu0
    %v1387 = vadd.f32 %v313, %v1384
    %v1388 = vtanh.pop %v1387
    %1389 = vmatprep.subr.mxu0 0.0
    %1390 = vmatpush1.msra.mxu0 %v146
    %1391 = vmatprep.subr.mxu0 0.0
    %1392 = vmatpush1.msra.mxu0 %v145
    %1393 = vmatprep.subr.mxu0 0.0
    %1394 = vmatpush1.msra.mxu0 %v144
    %1395 = vmatprep.subr.mxu0 0.0
    %1396 = vmatpush1.msra.mxu0 %v143
    %1397 = vmatprep.subr.mxu0 0.0
    %1398 = vmatpush1.msra.mxu0 %v142
    %1399 = vmatprep.subr.mxu0 0.0
    %1400 = vmatpush1.msra.mxu0 %v141
    %1401 = vmatprep.subr.mxu0 0.0
    %1402 = vmatpush1.msra.mxu0 %v140
    %1403 = vmatprep.subr.mxu0 0.0
    %1404 = vmatpush1.msra.mxu0 %v139
    %1405 = vmatprep.subr.mxu0 0.0
    %1406 = vmatpush1.msra.mxu0 %v138
    %1407 = vmatprep.subr.mxu0 0.0
    %1408 = vmatpush1.msra.mxu0 %v137
    %1409 = vmatprep.subr.mxu0 0.0
    %1410 = vmatpush1.msra.mxu0 %v136
    %1411 = vmatprep.subr.mxu0 0.0
    %1412 = vmatpush1.msra.mxu0 %v135
    %1413 = vmatprep.subr.mxu0 0.0
    %1414 = vmatpush1.msra.mxu0 %v134
    %1415 = vmatprep.subr.mxu0 0.0
    %1416 = vmatpush1.msra.mxu0 %v133
    %1417 = vmatprep.subr.mxu0 0.0
    %1418 = vmatpush1.msra.mxu0 %v132
    %1419 = vmatprep.subr.mxu0 0.0
    %1420 = vmatpush1.msra.mxu0 %v131
    %1421 = vmatprep.subr.mxu0 0.0
    %1422 = vmatpush2.msra.mxu0 %v162
    %1423 = vmatprep.subr.mxu0 0.0
    %1424 = vmatpush2.msra.mxu0 %v161
    %1425 = vmatprep.subr.mxu0 0.0
    %1426 = vmatpush2.msra.mxu0 %v160
    %1427 = vmatprep.subr.mxu0 0.0
    %1428 = vmatpush2.msra.mxu0 %v159
    %1429 = vmatprep.subr.mxu0 0.0
    %1430 = vmatpush2.msra.mxu0 %v158
    %1431 = vmatprep.subr.mxu0 0.0
    %1432 = vmatpush2.msra.mxu0 %v157
    %1433 = vmatprep.subr.mxu0 0.0
    %1434 = vmatpush2.msra.mxu0 %v156
    %1435 = vmatprep.subr.mxu0 0.0
    %1436 = vmatpush2.msra.mxu0 %v155
    %1437 = vmatprep.subr.mxu0 0.0
    %1438 = vmatpush2.msra.mxu0 %v154
    %1439 = vmatprep.subr.mxu0 0.0
    %1440 = vmatpush2.msra.mxu0 %v153
    %1441 = vmatprep.subr.mxu0 0.0
    %1442 = vmatpush2.msra.mxu0 %v152
    %1443 = vmatprep.subr.mxu0 0.0
    %1444 = vmatpush2.msra.mxu0 %v151
    %1445 = vmatprep.subr.mxu0 0.0
    %1446 = vmatpush2.msra.mxu0 %v150
    %1447 = vmatprep.subr.mxu0 0.0
    %1448 = vmatpush2.msra.mxu0 %v149
    %1449 = vmatprep.subr.mxu0 0.0
    %1450 = vmatpush2.msra.mxu0 %v148
    %1451 = vmatprep.subr.mxu0 0.0
    %1452 = vmatpush2.msra.mxu0 %v147
    %1453 = vmatprep.mubr.f32.mxu0 %v1316
    %1454 = vmatmul.mubr.f32.gmra.mxu0 %v1388
    %v1455 = vpop.f32.mrf.mxu0
    %v1456 = vadd.f32 %v168, %v1455
    %v1457 = vpop.f32.mrf.mxu0
    %1458 = vdwg.mxu0
    %v1459 = vtanh.pop %v1456
    %v1460 = vmax.f32 %v1459, 0.0
    %v1461 = vld [vmem:[#allocation4] sm:$0xff]
    %v1462 = vld [vmem:[#allocation4 + $0x8] sm:$0xff]
    %v1463 = vld [vmem:[#allocation4 + $0x10] sm:$0xff]
    %v1464 = vld [vmem:[#allocation4 + $0x18] sm:$0xff]
    %v1465 = vld [vmem:[#allocation4 + $0x20] sm:$0xff]
    %v1466 = vld [vmem:[#allocation4 + $0x28] sm:$0xff]
    %v1467 = vld [vmem:[#allocation4 + $0x30] sm:$0xff]
    %v1468 = vld [vmem:[#allocation4 + $0x38] sm:$0xff]
    %v1469 = vld [vmem:[#allocation4 + $0x40] sm:$0xff]
    %v1470 = vld [vmem:[#allocation4 + $0x48] sm:$0xff]
    %v1471 = vld [vmem:[#allocation4 + $0x50] sm:$0xff]
    %v1472 = vld [vmem:[#allocation4 + $0x58] sm:$0xff]
    %v1473 = vld [vmem:[#allocation4 + $0x60] sm:$0xff]
    %v1474 = vld [vmem:[#allocation4 + $0x68] sm:$0xff]
    %v1475 = vld [vmem:[#allocation4 + $0x70] sm:$0xff]
    %v1476 = vld [vmem:[#allocation4 + $0x78] sm:$0xff]
    %v1477 = vld [vmem:[#allocation4 + $0x80] sm:$0xff]
    %v1478 = vld [vmem:[#allocation4 + $0x88] sm:$0xff]
    %v1479 = vld [vmem:[#allocation4 + $0x90] sm:$0xff]
    %v1480 = vld [vmem:[#allocation4 + $0x98] sm:$0xff]
    %v1481 = vld [vmem:[#allocation4 + $0xa0] sm:$0xff]
    %v1482 = vld [vmem:[#allocation4 + $0xa8] sm:$0xff]
    %v1483 = vld [vmem:[#allocation4 + $0xb0] sm:$0xff]
    %v1484 = vld [vmem:[#allocation4 + $0xb8] sm:$0xff]
    %v1485 = vld [vmem:[#allocation4 + $0xc0] sm:$0xff]
    %v1486 = vld [vmem:[#allocation4 + $0xc8] sm:$0xff]
    %v1487 = vld [vmem:[#allocation4 + $0xd0] sm:$0xff]
    %v1488 = vld [vmem:[#allocation4 + $0xd8] sm:$0xff]
    %v1489 = vld [vmem:[#allocation4 + $0xe0] sm:$0xff]
    %v1490 = vld [vmem:[#allocation4 + $0xe8] sm:$0xff]
    %v1491 = vld [vmem:[#allocation4 + $0xf0] sm:$0xff]
    %v1492 = vld [vmem:[#allocation4 + $0xf8] sm:$0xff]
    %v1493 = vld [vmem:[#allocation4 + $0x100] sm:$0xff]
    %v1494 = vld [vmem:[#allocation4 + $0x108] sm:$0xff]
    %v1495 = vld [vmem:[#allocation4 + $0x110] sm:$0xff]
    %v1496 = vld [vmem:[#allocation4 + $0x118] sm:$0xff]
    %v1497 = vld [vmem:[#allocation4 + $0x120] sm:$0xff]
    %v1498 = vld [vmem:[#allocation4 + $0x128] sm:$0xff]
    %v1499 = vld [vmem:[#allocation4 + $0x130] sm:$0xff]
    %v1500 = vld [vmem:[#allocation4 + $0x138] sm:$0xff]
    %v1501 = vld [vmem:[#allocation4 + $0x140] sm:$0xff]
    %v1502 = vld [vmem:[#allocation4 + $0x148] sm:$0xff]
    %v1503 = vld [vmem:[#allocation4 + $0x150] sm:$0xff]
    %v1504 = vld [vmem:[#allocation4 + $0x158] sm:$0xff]
    %v1505 = vld [vmem:[#allocation4 + $0x160] sm:$0xff]
    %v1506 = vld [vmem:[#allocation4 + $0x168] sm:$0xff]
    %v1507 = vld [vmem:[#allocation4 + $0x170] sm:$0xff]
    %v1508 = vld [vmem:[#allocation4 + $0x178] sm:$0xff]
    %v1509 = vld [vmem:[#allocation4 + $0x180] sm:$0xff]
    %v1510 = vld [vmem:[#allocation4 + $0x188] sm:$0xff]
    %v1511 = vld [vmem:[#allocation4 + $0x190] sm:$0xff]
    %v1512 = vld [vmem:[#allocation4 + $0x198] sm:$0xff]
    %v1513 = vld [vmem:[#allocation4 + $0x1a0] sm:$0xff]
    %v1514 = vld [vmem:[#allocation4 + $0x1a8] sm:$0xff]
    %v1515 = vld [vmem:[#allocation4 + $0x1b0] sm:$0xff]
    %v1516 = vld [vmem:[#allocation4 + $0x1b8] sm:$0xff]
    %v1517 = vld [vmem:[#allocation4 + $0x1c0] sm:$0xff]
    %v1518 = vld [vmem:[#allocation4 + $0x1c8] sm:$0xff]
    %v1519 = vld [vmem:[#allocation4 + $0x1d0] sm:$0xff]
    %v1520 = vld [vmem:[#allocation4 + $0x1d8] sm:$0xff]
    %v1521 = vld [vmem:[#allocation4 + $0x1e0] sm:$0xff]
    %v1522 = vld [vmem:[#allocation4 + $0x1e8] sm:$0xff]
    %v1523 = vld [vmem:[#allocation4 + $0x1f0] sm:$0xff]
    %v1524 = vld [vmem:[#allocation4 + $0x1f8] sm:$0xff]
    %v1525 = vld [vmem:[%s7] sm:$0xf]
    %v1527 = vlaneseq
    %v1528 = vshrl.u32 %v1527, 7
    %v1529 = vsub.s32 0, %v1528
    %v1530 = vrot.slane %v1525, %v1529
    %v1531 = vlaneseq
    %v1532 = vshrl.u32 %v1531, 7
    %v1533 = vsub.s32 1, %v1532
    %v1534 = vrot.slane %v1525, %v1533
    %v1535 = vlaneseq
    %v1536 = vshrl.u32 %v1535, 7
    %v1537 = vsub.s32 2, %v1536
    %v1538 = vrot.slane %v1525, %v1537
    %v1539 = vlaneseq
    %v1540 = vshrl.u32 %v1539, 7
    %v1541 = vsub.s32 3, %v1540
    %v1542 = vrot.slane %v1525, %v1541
    %1547 = vmatprep.subr.mxu0 %v1522
    %1548 = vmatpush1.msra.mxu0 %v1521
    %1549 = vmatprep.subr.mxu0 %v1518
    %1550 = vmatpush1.msra.mxu0 %v1517
    %1551 = vmatprep.subr.mxu0 %v1514
    %1552 = vmatpush1.msra.mxu0 %v1513
    %1553 = vmatprep.subr.mxu0 %v1510
    %1554 = vmatpush1.msra.mxu0 %v1509
    %1555 = vmatprep.subr.mxu0 %v1506
    %1556 = vmatpush1.msra.mxu0 %v1505
    %1557 = vmatprep.subr.mxu0 %v1502
    %1558 = vmatpush1.msra.mxu0 %v1501
    %1559 = vmatprep.subr.mxu0 %v1498
    %1560 = vmatpush1.msra.mxu0 %v1497
    %1561 = vmatprep.subr.mxu0 %v1494
    %1562 = vmatpush1.msra.mxu0 %v1493
    %1563 = vmatprep.subr.mxu0 %v1490
    %1564 = vmatpush1.msra.mxu0 %v1489
    %1565 = vmatprep.subr.mxu0 %v1486
    %1566 = vmatpush1.msra.mxu0 %v1485
    %1567 = vmatprep.subr.mxu0 %v1482
    %1568 = vmatpush1.msra.mxu0 %v1481
    %1569 = vmatprep.subr.mxu0 %v1478
    %1570 = vmatpush1.msra.mxu0 %v1477
    %1571 = vmatprep.subr.mxu0 %v1474
    %1572 = vmatpush1.msra.mxu0 %v1473
    %1573 = vmatprep.subr.mxu0 %v1470
    %1574 = vmatpush1.msra.mxu0 %v1469
    %1575 = vmatprep.subr.mxu0 %v1466
    %1576 = vmatpush1.msra.mxu0 %v1465
    %1577 = vmatprep.subr.mxu0 %v1462
    %1578 = vmatpush1.msra.mxu0 %v1461
    %1579 = vmatprep.subr.mxu0 0.0
    %1580 = vmatpush2.msra.mxu0 0.0
    %1581 = vmatprep.subr.mxu0 0.0
    %1582 = vmatpush2.msra.mxu0 0.0
    %1583 = vmatprep.subr.mxu0 0.0
    %1584 = vmatpush2.msra.mxu0 0.0
    %1585 = vmatprep.subr.mxu0 0.0
    %1586 = vmatpush2.msra.mxu0 0.0
    %1587 = vmatprep.subr.mxu0 0.0
    %1588 = vmatpush2.msra.mxu0 0.0
    %1589 = vmatprep.subr.mxu0 0.0
    %1590 = vmatpush2.msra.mxu0 0.0
    %1591 = vmatprep.subr.mxu0 0.0
    %1592 = vmatpush2.msra.mxu0 0.0
    %1593 = vmatprep.subr.mxu0 0.0
    %1594 = vmatpush2.msra.mxu0 0.0
    %1595 = vmatprep.subr.mxu0 0.0
    %1596 = vmatpush2.msra.mxu0 0.0
    %1597 = vmatprep.subr.mxu0 0.0
    %1598 = vmatpush2.msra.mxu0 0.0
    %1599 = vmatprep.subr.mxu0 0.0
    %1600 = vmatpush2.msra.mxu0 0.0
    %1601 = vmatprep.subr.mxu0 0.0
    %1602 = vmatpush2.msra.mxu0 0.0
    %1603 = vmatprep.subr.mxu0 0.0
    %1604 = vmatpush2.msra.mxu0 0.0
    %1605 = vmatprep.subr.mxu0 0.0
    %1606 = vmatpush2.msra.mxu0 0.0
    %1607 = vmatprep.subr.mxu0 0.0
    %1608 = vmatpush2.msra.mxu0 0.0
    %1609 = vmatprep.subr.mxu0 0.0
    %1610 = vmatpush2.msra.mxu0 0.0
    %1611 = vmatprep.mubr.f32.mxu0 0.0
    %1612 = vmatmul.mubr.f32.gmra.mxu0 %v1460
    %v1613 = vpop.f32.mrf.mxu0
    %v1614 = vadd.f32 %v1530, %v1613
    %v1615 = vpop.f32.mrf.mxu0
    %v1616 = vadd.f32 %v1534, %v1615
    %1617 = vdwg.mxu0
    %1618 = vmatprep.subr.mxu0 %v1524
    %1619 = vmatpush1.msra.mxu0 %v1523
    %1620 = vmatprep.subr.mxu0 %v1520
    %1621 = vmatpush1.msra.mxu0 %v1519
    %1622 = vmatprep.subr.mxu0 %v1516
    %1623 = vmatpush1.msra.mxu0 %v1515
    %1624 = vmatprep.subr.mxu0 %v1512
    %1625 = vmatpush1.msra.mxu0 %v1511
    %1626 = vmatprep.subr.mxu0 %v1508
    %1627 = vmatpush1.msra.mxu0 %v1507
    %1628 = vmatprep.subr.mxu0 %v1504
    %1629 = vmatpush1.msra.mxu0 %v1503
    %1630 = vmatprep.subr.mxu0 %v1500
    %1631 = vmatpush1.msra.mxu0 %v1499
    %1632 = vmatprep.subr.mxu0 %v1496
    %1633 = vmatpush1.msra.mxu0 %v1495
    %1634 = vmatprep.subr.mxu0 %v1492
    %1635 = vmatpush1.msra.mxu0 %v1491
    %1636 = vmatprep.subr.mxu0 %v1488
    %1637 = vmatpush1.msra.mxu0 %v1487
    %1638 = vmatprep.subr.mxu0 %v1484
    %1639 = vmatpush1.msra.mxu0 %v1483
    %1640 = vmatprep.subr.mxu0 %v1480
    %1641 = vmatpush1.msra.mxu0 %v1479
    %1642 = vmatprep.subr.mxu0 %v1476
    %1643 = vmatpush1.msra.mxu0 %v1475
    %1644 = vmatprep.subr.mxu0 %v1472
    %1645 = vmatpush1.msra.mxu0 %v1471
    %1646 = vmatprep.subr.mxu0 %v1468
    %1647 = vmatpush1.msra.mxu0 %v1467
    %1648 = vmatprep.subr.mxu0 %v1464
    %1649 = vmatpush1.msra.mxu0 %v1463
    %1650 = vmatprep.subr.mxu0 0.0
    %1651 = vmatpush2.msra.mxu0 0.0
    %1652 = vmatprep.subr.mxu0 0.0
    %1653 = vmatpush2.msra.mxu0 0.0
    %1654 = vmatprep.subr.mxu0 0.0
    %1655 = vmatpush2.msra.mxu0 0.0
    %1656 = vmatprep.subr.mxu0 0.0
    %1657 = vmatpush2.msra.mxu0 0.0
    %1658 = vmatprep.subr.mxu0 0.0
    %1659 = vmatpush2.msra.mxu0 0.0
    %1660 = vmatprep.subr.mxu0 0.0
    %1661 = vmatpush2.msra.mxu0 0.0
    %1662 = vmatprep.subr.mxu0 0.0
    %1663 = vmatpush2.msra.mxu0 0.0
    %1664 = vmatprep.subr.mxu0 0.0
    %1665 = vmatpush2.msra.mxu0 0.0
    %1666 = vmatprep.subr.mxu0 0.0
    %1667 = vmatpush2.msra.mxu0 0.0
    %1668 = vmatprep.subr.mxu0 0.0
    %1669 = vmatpush2.msra.mxu0 0.0
    %1670 = vmatprep.subr.mxu0 0.0
    %1671 = vmatpush2.msra.mxu0 0.0
    %1672 = vmatprep.subr.mxu0 0.0
    %1673 = vmatpush2.msra.mxu0 0.0
    %1674 = vmatprep.subr.mxu0 0.0
    %1675 = vmatpush2.msra.mxu0 0.0
    %1676 = vmatprep.subr.mxu0 0.0
    %1677 = vmatpush2.msra.mxu0 0.0
    %1678 = vmatprep.subr.mxu0 0.0
    %1679 = vmatpush2.msra.mxu0 0.0
    %1680 = vmatprep.subr.mxu0 0.0
    %1681 = vmatpush2.msra.mxu0 0.0
    %1682 = vmatprep.mubr.f32.mxu0 0.0
    %1683 = vmatmul.mubr.f32.gmra.mxu0 %v1460
    %v1684 = vpop.f32.mrf.mxu0
    %v1685 = vadd.f32 %v1538, %v1684
    %v1686 = vpop.f32.mrf.mxu0
    %v1687 = vadd.f32 %v1542, %v1686
    %1688 = vdwg.mxu0
    %v1689 = vmax.f32 %v1614, 0.0
    %v1690 = vmax.f32 %v1616, 0.0
    %v1691 = vmax.f32 %v1685, 0.0
    %v1692 = vmax.f32 %v1687, 0.0
    %v1693 = vld [vmem:[#allocation6] sm:$0xff]
    %v1694 = vld [vmem:[#allocation6 + $0x8] sm:$0xff]
    %v1695 = vld [vmem:[#allocation6 + $0x10] sm:$0xff]
    %v1696 = vld [vmem:[#allocation6 + $0x18] sm:$0xff]
    %v1697 = vld [vmem:[#allocation6 + $0x20] sm:$0xff]
    %v1698 = vld [vmem:[#allocation6 + $0x28] sm:$0xff]
    %v1699 = vld [vmem:[#allocation6 + $0x30] sm:$0xff]
    %v1700 = vld [vmem:[#allocation6 + $0x38] sm:$0xff]
    %v1701 = vld [vmem:[#allocation6 + $0x40] sm:$0xff]
    %v1702 = vld [vmem:[#allocation6 + $0x48] sm:$0xff]
    %v1703 = vld [vmem:[#allocation6 + $0x50] sm:$0xff]
    %v1704 = vld [vmem:[#allocation6 + $0x58] sm:$0xff]
    %v1705 = vld [vmem:[#allocation6 + $0x60] sm:$0xff]
    %v1706 = vld [vmem:[#allocation6 + $0x68] sm:$0xff]
    %v1707 = vld [vmem:[#allocation6 + $0x70] sm:$0xff]
    %v1708 = vld [vmem:[#allocation6 + $0x78] sm:$0xff]
    %v1709 = vld [vmem:[#allocation6 + $0x80] sm:$0xff]
    %v1710 = vld [vmem:[#allocation6 + $0x88] sm:$0xff]
    %v1711 = vld [vmem:[#allocation6 + $0x90] sm:$0xff]
    %v1712 = vld [vmem:[#allocation6 + $0x98] sm:$0xff]
    %v1713 = vld [vmem:[#allocation6 + $0xa0] sm:$0xff]
    %v1714 = vld [vmem:[#allocation6 + $0xa8] sm:$0xff]
    %v1715 = vld [vmem:[#allocation6 + $0xb0] sm:$0xff]
    %v1716 = vld [vmem:[#allocation6 + $0xb8] sm:$0xff]
    %v1717 = vld [vmem:[#allocation6 + $0xc0] sm:$0xff]
    %v1718 = vld [vmem:[#allocation6 + $0xc8] sm:$0xff]
    %v1719 = vld [vmem:[#allocation6 + $0xd0] sm:$0xff]
    %v1720 = vld [vmem:[#allocation6 + $0xd8] sm:$0xff]
    %v1721 = vld [vmem:[#allocation6 + $0xe0] sm:$0xff]
    %v1722 = vld [vmem:[#allocation6 + $0xe8] sm:$0xff]
    %v1723 = vld [vmem:[#allocation6 + $0xf0] sm:$0xff]
    %v1724 = vld [vmem:[#allocation6 + $0xf8] sm:$0xff]
    %v1725 = vld [vmem:[#allocation6 + $0x100] sm:$0xff]
    %v1726 = vld [vmem:[#allocation6 + $0x108] sm:$0xff]
    %v1727 = vld [vmem:[#allocation6 + $0x110] sm:$0xff]
    %v1728 = vld [vmem:[#allocation6 + $0x118] sm:$0xff]
    %v1729 = vld [vmem:[#allocation6 + $0x120] sm:$0xff]
    %v1730 = vld [vmem:[#allocation6 + $0x128] sm:$0xff]
    %v1731 = vld [vmem:[#allocation6 + $0x130] sm:$0xff]
    %v1732 = vld [vmem:[#allocation6 + $0x138] sm:$0xff]
    %v1733 = vld [vmem:[#allocation6 + $0x140] sm:$0xff]
    %v1734 = vld [vmem:[#allocation6 + $0x148] sm:$0xff]
    %v1735 = vld [vmem:[#allocation6 + $0x150] sm:$0xff]
    %v1736 = vld [vmem:[#allocation6 + $0x158] sm:$0xff]
    %v1737 = vld [vmem:[#allocation6 + $0x160] sm:$0xff]
    %v1738 = vld [vmem:[#allocation6 + $0x168] sm:$0xff]
    %v1739 = vld [vmem:[#allocation6 + $0x170] sm:$0xff]
    %v1740 = vld [vmem:[#allocation6 + $0x178] sm:$0xff]
    %v1741 = vld [vmem:[#allocation6 + $0x180] sm:$0xff]
    %v1742 = vld [vmem:[#allocation6 + $0x188] sm:$0xff]
    %v1743 = vld [vmem:[#allocation6 + $0x190] sm:$0xff]
    %v1744 = vld [vmem:[#allocation6 + $0x198] sm:$0xff]
    %v1745 = vld [vmem:[#allocation6 + $0x1a0] sm:$0xff]
    %v1746 = vld [vmem:[#allocation6 + $0x1a8] sm:$0xff]
    %v1747 = vld [vmem:[#allocation6 + $0x1b0] sm:$0xff]
    %v1748 = vld [vmem:[#allocation6 + $0x1b8] sm:$0xff]
    %v1749 = vld [vmem:[#allocation6 + $0x1c0] sm:$0xff]
    %v1750 = vld [vmem:[#allocation6 + $0x1c8] sm:$0xff]
    %v1751 = vld [vmem:[#allocation6 + $0x1d0] sm:$0xff]
    %v1752 = vld [vmem:[#allocation6 + $0x1d8] sm:$0xff]
    %v1753 = vld [vmem:[#allocation6 + $0x1e0] sm:$0xff]
    %v1754 = vld [vmem:[#allocation6 + $0x1e8] sm:$0xff]
    %v1755 = vld [vmem:[#allocation6 + $0x1f0] sm:$0xff]
    %v1756 = vld [vmem:[#allocation6 + $0x1f8] sm:$0xff]
    %v1757 = vld [vmem:[#allocation6 + $0x200] sm:$0xff]
    %v1758 = vld [vmem:[#allocation6 + $0x208] sm:$0xff]
    %v1759 = vld [vmem:[#allocation6 + $0x210] sm:$0xff]
    %v1760 = vld [vmem:[#allocation6 + $0x218] sm:$0xff]
    %v1761 = vld [vmem:[#allocation6 + $0x220] sm:$0xff]
    %v1762 = vld [vmem:[#allocation6 + $0x228] sm:$0xff]
    %v1763 = vld [vmem:[#allocation6 + $0x230] sm:$0xff]
    %v1764 = vld [vmem:[#allocation6 + $0x238] sm:$0xff]
    %v1765 = vld [vmem:[#allocation6 + $0x240] sm:$0xff]
    %v1766 = vld [vmem:[#allocation6 + $0x248] sm:$0xff]
    %v1767 = vld [vmem:[#allocation6 + $0x250] sm:$0xff]
    %v1768 = vld [vmem:[#allocation6 + $0x258] sm:$0xff]
    %v1769 = vld [vmem:[#allocation6 + $0x260] sm:$0xff]
    %v1770 = vld [vmem:[#allocation6 + $0x268] sm:$0xff]
    %v1771 = vld [vmem:[#allocation6 + $0x270] sm:$0xff]
    %v1772 = vld [vmem:[#allocation6 + $0x278] sm:$0xff]
    %v1773 = vld [vmem:[#allocation6 + $0x280] sm:$0xff]
    %v1774 = vld [vmem:[#allocation6 + $0x288] sm:$0xff]
    %v1775 = vld [vmem:[#allocation6 + $0x290] sm:$0xff]
    %v1776 = vld [vmem:[#allocation6 + $0x298] sm:$0xff]
    %v1777 = vld [vmem:[#allocation6 + $0x2a0] sm:$0xff]
    %v1778 = vld [vmem:[#allocation6 + $0x2a8] sm:$0xff]
    %v1779 = vld [vmem:[#allocation6 + $0x2b0] sm:$0xff]
    %v1780 = vld [vmem:[#allocation6 + $0x2b8] sm:$0xff]
    %v1781 = vld [vmem:[#allocation6 + $0x2c0] sm:$0xff]
    %v1782 = vld [vmem:[#allocation6 + $0x2c8] sm:$0xff]
    %v1783 = vld [vmem:[#allocation6 + $0x2d0] sm:$0xff]
    %v1784 = vld [vmem:[#allocation6 + $0x2d8] sm:$0xff]
    %v1785 = vld [vmem:[#allocation6 + $0x2e0] sm:$0xff]
    %v1786 = vld [vmem:[#allocation6 + $0x2e8] sm:$0xff]
    %v1787 = vld [vmem:[#allocation6 + $0x2f0] sm:$0xff]
    %v1788 = vld [vmem:[#allocation6 + $0x2f8] sm:$0xff]
    %v1789 = vld [vmem:[#allocation6 + $0x300] sm:$0xff]
    %v1790 = vld [vmem:[#allocation6 + $0x308] sm:$0xff]
    %v1791 = vld [vmem:[#allocation6 + $0x310] sm:$0xff]
    %v1792 = vld [vmem:[#allocation6 + $0x318] sm:$0xff]
    %v1793 = vld [vmem:[#allocation6 + $0x320] sm:$0xff]
    %v1794 = vld [vmem:[#allocation6 + $0x328] sm:$0xff]
    %v1795 = vld [vmem:[#allocation6 + $0x330] sm:$0xff]
    %v1796 = vld [vmem:[#allocation6 + $0x338] sm:$0xff]
    %v1797 = vld [vmem:[#allocation6 + $0x340] sm:$0xff]
    %v1798 = vld [vmem:[#allocation6 + $0x348] sm:$0xff]
    %v1799 = vld [vmem:[#allocation6 + $0x350] sm:$0xff]
    %v1800 = vld [vmem:[#allocation6 + $0x358] sm:$0xff]
    %v1801 = vld [vmem:[#allocation6 + $0x360] sm:$0xff]
    %v1802 = vld [vmem:[#allocation6 + $0x368] sm:$0xff]
    %v1803 = vld [vmem:[#allocation6 + $0x370] sm:$0xff]
    %v1804 = vld [vmem:[#allocation6 + $0x378] sm:$0xff]
    %v1805 = vld [vmem:[#allocation6 + $0x380] sm:$0xff]
    %v1806 = vld [vmem:[#allocation6 + $0x388] sm:$0xff]
    %v1807 = vld [vmem:[#allocation6 + $0x390] sm:$0xff]
    %v1808 = vld [vmem:[#allocation6 + $0x398] sm:$0xff]
    %v1809 = vld [vmem:[#allocation6 + $0x3a0] sm:$0xff]
    %v1810 = vld [vmem:[#allocation6 + $0x3a8] sm:$0xff]
    %v1811 = vld [vmem:[#allocation6 + $0x3b0] sm:$0xff]
    %v1812 = vld [vmem:[#allocation6 + $0x3b8] sm:$0xff]
    %v1813 = vld [vmem:[#allocation6 + $0x3c0] sm:$0xff]
    %v1814 = vld [vmem:[#allocation6 + $0x3c8] sm:$0xff]
    %v1815 = vld [vmem:[#allocation6 + $0x3d0] sm:$0xff]
    %v1816 = vld [vmem:[#allocation6 + $0x3d8] sm:$0xff]
    %v1817 = vld [vmem:[#allocation6 + $0x3e0] sm:$0xff]
    %v1818 = vld [vmem:[#allocation6 + $0x3e8] sm:$0xff]
    %v1819 = vld [vmem:[#allocation6 + $0x3f0] sm:$0xff]
    %v1820 = vld [vmem:[#allocation6 + $0x3f8] sm:$0xff]
    %v1821 = vld [vmem:[%s9] sm:$0x3]
    %v1823 = vlaneseq
    %v1824 = vshrl.u32 %v1823, 7
    %v1825 = vsub.s32 0, %v1824
    %v1826 = vrot.slane %v1821, %v1825
    %v1827 = vlaneseq
    %v1828 = vshrl.u32 %v1827, 7
    %v1829 = vsub.s32 1, %v1828
    %v1830 = vrot.slane %v1821, %v1829
    %1833 = vmatprep.subr.mxu0 %v1724
    %1834 = vmatpush1.msra.mxu0 %v1723
    %1835 = vmatprep.subr.mxu0 %v1722
    %1836 = vmatpush1.msra.mxu0 %v1721
    %1837 = vmatprep.subr.mxu0 %v1720
    %1838 = vmatpush1.msra.mxu0 %v1719
    %1839 = vmatprep.subr.mxu0 %v1718
    %1840 = vmatpush1.msra.mxu0 %v1717
    %1841 = vmatprep.subr.mxu0 %v1716
    %1842 = vmatpush1.msra.mxu0 %v1715
    %1843 = vmatprep.subr.mxu0 %v1714
    %1844 = vmatpush1.msra.mxu0 %v1713
    %1845 = vmatprep.subr.mxu0 %v1712
    %1846 = vmatpush1.msra.mxu0 %v1711
    %1847 = vmatprep.subr.mxu0 %v1710
    %1848 = vmatpush1.msra.mxu0 %v1709
    %1849 = vmatprep.subr.mxu0 %v1708
    %1850 = vmatpush1.msra.mxu0 %v1707
    %1851 = vmatprep.subr.mxu0 %v1706
    %1852 = vmatpush1.msra.mxu0 %v1705
    %1853 = vmatprep.subr.mxu0 %v1704
    %1854 = vmatpush1.msra.mxu0 %v1703
    %1855 = vmatprep.subr.mxu0 %v1702
    %1856 = vmatpush1.msra.mxu0 %v1701
    %1857 = vmatprep.subr.mxu0 %v1700
    %1858 = vmatpush1.msra.mxu0 %v1699
    %1859 = vmatprep.subr.mxu0 %v1698
    %1860 = vmatpush1.msra.mxu0 %v1697
    %1861 = vmatprep.subr.mxu0 %v1696
    %1862 = vmatpush1.msra.mxu0 %v1695
    %1863 = vmatprep.subr.mxu0 %v1694
    %1864 = vmatpush1.msra.mxu0 %v1693
    %1865 = vmatprep.subr.mxu0 %v1756
    %1866 = vmatpush2.msra.mxu0 %v1755
    %1867 = vmatprep.subr.mxu0 %v1754
    %1868 = vmatpush2.msra.mxu0 %v1753
    %1869 = vmatprep.subr.mxu0 %v1752
    %1870 = vmatpush2.msra.mxu0 %v1751
    %1871 = vmatprep.subr.mxu0 %v1750
    %1872 = vmatpush2.msra.mxu0 %v1749
    %1873 = vmatprep.subr.mxu0 %v1748
    %1874 = vmatpush2.msra.mxu0 %v1747
    %1875 = vmatprep.subr.mxu0 %v1746
    %1876 = vmatpush2.msra.mxu0 %v1745
    %1877 = vmatprep.subr.mxu0 %v1744
    %1878 = vmatpush2.msra.mxu0 %v1743
    %1879 = vmatprep.subr.mxu0 %v1742
    %1880 = vmatpush2.msra.mxu0 %v1741
    %1881 = vmatprep.subr.mxu0 %v1740
    %1882 = vmatpush2.msra.mxu0 %v1739
    %1883 = vmatprep.subr.mxu0 %v1738
    %1884 = vmatpush2.msra.mxu0 %v1737
    %1885 = vmatprep.subr.mxu0 %v1736
    %1886 = vmatpush2.msra.mxu0 %v1735
    %1887 = vmatprep.subr.mxu0 %v1734
    %1888 = vmatpush2.msra.mxu0 %v1733
    %1889 = vmatprep.subr.mxu0 %v1732
    %1890 = vmatpush2.msra.mxu0 %v1731
    %1891 = vmatprep.subr.mxu0 %v1730
    %1892 = vmatpush2.msra.mxu0 %v1729
    %1893 = vmatprep.subr.mxu0 %v1728
    %1894 = vmatpush2.msra.mxu0 %v1727
    %1895 = vmatprep.subr.mxu0 %v1726
    %1896 = vmatpush2.msra.mxu0 %v1725
    %1897 = vmatprep.mubr.f32.mxu0 %v1690
    %1898 = vmatmul.mubr.f32.gmra.mxu0 %v1689
    %v1899 = vpop.f32.mrf.mxu0
    %v1900 = vadd.f32 %v1826, %v1899
    %v1901 = vpop.f32.mrf.mxu0
    %v1902 = vadd.f32 %v1830, %v1901
    %1903 = vdwg.mxu0
    %1904 = vmatprep.subr.mxu0 %v1788
    %1905 = vmatpush1.msra.mxu0 %v1787
    %1906 = vmatprep.subr.mxu0 %v1786
    %1907 = vmatpush1.msra.mxu0 %v1785
    %1908 = vmatprep.subr.mxu0 %v1784
    %1909 = vmatpush1.msra.mxu0 %v1783
    %1910 = vmatprep.subr.mxu0 %v1782
    %1911 = vmatpush1.msra.mxu0 %v1781
    %1912 = vmatprep.subr.mxu0 %v1780
    %1913 = vmatpush1.msra.mxu0 %v1779
    %1914 = vmatprep.subr.mxu0 %v1778
    %1915 = vmatpush1.msra.mxu0 %v1777
    %1916 = vmatprep.subr.mxu0 %v1776
    %1917 = vmatpush1.msra.mxu0 %v1775
    %1918 = vmatprep.subr.mxu0 %v1774
    %1919 = vmatpush1.msra.mxu0 %v1773
    %1920 = vmatprep.subr.mxu0 %v1772
    %1921 = vmatpush1.msra.mxu0 %v1771
    %1922 = vmatprep.subr.mxu0 %v1770
    %1923 = vmatpush1.msra.mxu0 %v1769
    %1924 = vmatprep.subr.mxu0 %v1768
    %1925 = vmatpush1.msra.mxu0 %v1767
    %1926 = vmatprep.subr.mxu0 %v1766
    %1927 = vmatpush1.msra.mxu0 %v1765
    %1928 = vmatprep.subr.mxu0 %v1764
    %1929 = vmatpush1.msra.mxu0 %v1763
    %1930 = vmatprep.subr.mxu0 %v1762
    %1931 = vmatpush1.msra.mxu0 %v1761
    %1932 = vmatprep.subr.mxu0 %v1760
    %1933 = vmatpush1.msra.mxu0 %v1759
    %1934 = vmatprep.subr.mxu0 %v1758
    %1935 = vmatpush1.msra.mxu0 %v1757
    %1936 = vmatprep.subr.mxu0 %v1820
    %1937 = vmatpush2.msra.mxu0 %v1819
    %1938 = vmatprep.subr.mxu0 %v1818
    %1939 = vmatpush2.msra.mxu0 %v1817
    %1940 = vmatprep.subr.mxu0 %v1816
    %1941 = vmatpush2.msra.mxu0 %v1815
    %1942 = vmatprep.subr.mxu0 %v1814
    %1943 = vmatpush2.msra.mxu0 %v1813
    %1944 = vmatprep.subr.mxu0 %v1812
    %1945 = vmatpush2.msra.mxu0 %v1811
    %1946 = vmatprep.subr.mxu0 %v1810
    %1947 = vmatpush2.msra.mxu0 %v1809
    %1948 = vmatprep.subr.mxu0 %v1808
    %1949 = vmatpush2.msra.mxu0 %v1807
    %1950 = vmatprep.subr.mxu0 %v1806
    %1951 = vmatpush2.msra.mxu0 %v1805
    %1952 = vmatprep.subr.mxu0 %v1804
    %1953 = vmatpush2.msra.mxu0 %v1803
    %1954 = vmatprep.subr.mxu0 %v1802
    %1955 = vmatpush2.msra.mxu0 %v1801
    %1956 = vmatprep.subr.mxu0 %v1800
    %1957 = vmatpush2.msra.mxu0 %v1799
    %1958 = vmatprep.subr.mxu0 %v1798
    %1959 = vmatpush2.msra.mxu0 %v1797
    %1960 = vmatprep.subr.mxu0 %v1796
    %1961 = vmatpush2.msra.mxu0 %v1795
    %1962 = vmatprep.subr.mxu0 %v1794
    %1963 = vmatpush2.msra.mxu0 %v1793
    %1964 = vmatprep.subr.mxu0 %v1792
    %1965 = vmatpush2.msra.mxu0 %v1791
    %1966 = vmatprep.subr.mxu0 %v1790
    %1967 = vmatpush2.msra.mxu0 %v1789
    %1968 = vmatprep.mubr.f32.mxu0 %v1692
    %1969 = vmatmul.mubr.f32.gmra.mxu0 %v1691
    %v1970 = vpop.f32.mrf.mxu0
    %v1971 = vadd.f32 %v1900, %v1970
    %v1972 = vpop.f32.mrf.mxu0
    %v1973 = vadd.f32 %v1902, %v1972
    %1974 = vdwg.mxu0
    %v1975 = vmax.f32 %v1971, 0.0
    %v1976 = vmax.f32 %v1973, 0.0
    %v1977 = vld [vmem:[#allocation7] sm:$0xff]
    %v1978 = vld [vmem:[#allocation7 + $0x8] sm:$0xff]
    %v1979 = vld [vmem:[#allocation7 + $0x10] sm:$0xff]
    %v1980 = vld [vmem:[#allocation7 + $0x18] sm:$0xff]
    %v1981 = vld [vmem:[#allocation7 + $0x20] sm:$0xff]
    %v1982 = vld [vmem:[#allocation7 + $0x28] sm:$0xff]
    %v1983 = vld [vmem:[#allocation7 + $0x30] sm:$0xff]
    %v1984 = vld [vmem:[#allocation7 + $0x38] sm:$0xff]
    %v1985 = vld [vmem:[#allocation7 + $0x40] sm:$0xff]
    %v1986 = vld [vmem:[#allocation7 + $0x48] sm:$0xff]
    %v1987 = vld [vmem:[#allocation7 + $0x50] sm:$0xff]
    %v1988 = vld [vmem:[#allocation7 + $0x58] sm:$0xff]
    %v1989 = vld [vmem:[#allocation7 + $0x60] sm:$0xff]
    %v1990 = vld [vmem:[#allocation7 + $0x68] sm:$0xff]
    %v1991 = vld [vmem:[#allocation7 + $0x70] sm:$0xff]
    %v1992 = vld [vmem:[#allocation7 + $0x78] sm:$0xff]
    %v1993 = vld [vmem:[#allocation7 + $0x80] sm:$0xff]
    %v1994 = vld [vmem:[#allocation7 + $0x88] sm:$0xff]
    %v1995 = vld [vmem:[#allocation7 + $0x90] sm:$0xff]
    %v1996 = vld [vmem:[#allocation7 + $0x98] sm:$0xff]
    %v1997 = vld [vmem:[#allocation7 + $0xa0] sm:$0xff]
    %v1998 = vld [vmem:[#allocation7 + $0xa8] sm:$0xff]
    %v1999 = vld [vmem:[#allocation7 + $0xb0] sm:$0xff]
    %v2000 = vld [vmem:[#allocation7 + $0xb8] sm:$0xff]
    %v2001 = vld [vmem:[#allocation7 + $0xc0] sm:$0xff]
    %v2002 = vld [vmem:[#allocation7 + $0xc8] sm:$0xff]
    %v2003 = vld [vmem:[#allocation7 + $0xd0] sm:$0xff]
    %v2004 = vld [vmem:[#allocation7 + $0xd8] sm:$0xff]
    %v2005 = vld [vmem:[#allocation7 + $0xe0] sm:$0xff]
    %v2006 = vld [vmem:[#allocation7 + $0xe8] sm:$0xff]
    %v2007 = vld [vmem:[#allocation7 + $0xf0] sm:$0xff]
    %v2008 = vld [vmem:[#allocation7 + $0xf8] sm:$0xff]
    %v2009 = vld [vmem:[%s11] sm:$0x1]
    %v2011 = vlaneseq
    %v2012 = vshrl.u32 %v2011, 7
    %v2013 = vsub.s32 0, %v2012
    %v2014 = vrot.slane %v2009, %v2013
    %2016 = vmatprep.subr.mxu0 0.0
    %2017 = vmatpush1.msra.mxu0 %v1992
    %2018 = vmatprep.subr.mxu0 0.0
    %2019 = vmatpush1.msra.mxu0 %v1991
    %2020 = vmatprep.subr.mxu0 0.0
    %2021 = vmatpush1.msra.mxu0 %v1990
    %2022 = vmatprep.subr.mxu0 0.0
    %2023 = vmatpush1.msra.mxu0 %v1989
    %2024 = vmatprep.subr.mxu0 0.0
    %2025 = vmatpush1.msra.mxu0 %v1988
    %2026 = vmatprep.subr.mxu0 0.0
    %2027 = vmatpush1.msra.mxu0 %v1987
    %2028 = vmatprep.subr.mxu0 0.0
    %2029 = vmatpush1.msra.mxu0 %v1986
    %2030 = vmatprep.subr.mxu0 0.0
    %2031 = vmatpush1.msra.mxu0 %v1985
    %2032 = vmatprep.subr.mxu0 0.0
    %2033 = vmatpush1.msra.mxu0 %v1984
    %2034 = vmatprep.subr.mxu0 0.0
    %2035 = vmatpush1.msra.mxu0 %v1983
    %2036 = vmatprep.subr.mxu0 0.0
    %2037 = vmatpush1.msra.mxu0 %v1982
    %2038 = vmatprep.subr.mxu0 0.0
    %2039 = vmatpush1.msra.mxu0 %v1981
    %2040 = vmatprep.subr.mxu0 0.0
    %2041 = vmatpush1.msra.mxu0 %v1980
    %2042 = vmatprep.subr.mxu0 0.0
    %2043 = vmatpush1.msra.mxu0 %v1979
    %2044 = vmatprep.subr.mxu0 0.0
    %2045 = vmatpush1.msra.mxu0 %v1978
    %2046 = vmatprep.subr.mxu0 0.0
    %2047 = vmatpush1.msra.mxu0 %v1977
    %2048 = vmatprep.subr.mxu0 0.0
    %2049 = vmatpush2.msra.mxu0 %v2008
    %2050 = vmatprep.subr.mxu0 0.0
    %2051 = vmatpush2.msra.mxu0 %v2007
    %2052 = vmatprep.subr.mxu0 0.0
    %2053 = vmatpush2.msra.mxu0 %v2006
    %2054 = vmatprep.subr.mxu0 0.0
    %2055 = vmatpush2.msra.mxu0 %v2005
    %2056 = vmatprep.subr.mxu0 0.0
    %2057 = vmatpush2.msra.mxu0 %v2004
    %2058 = vmatprep.subr.mxu0 0.0
    %2059 = vmatpush2.msra.mxu0 %v2003
    %2060 = vmatprep.subr.mxu0 0.0
    %2061 = vmatpush2.msra.mxu0 %v2002
    %2062 = vmatprep.subr.mxu0 0.0
    %2063 = vmatpush2.msra.mxu0 %v2001
    %2064 = vmatprep.subr.mxu0 0.0
    %2065 = vmatpush2.msra.mxu0 %v2000
    %2066 = vmatprep.subr.mxu0 0.0
    %2067 = vmatpush2.msra.mxu0 %v1999
    %2068 = vmatprep.subr.mxu0 0.0
    %2069 = vmatpush2.msra.mxu0 %v1998
    %2070 = vmatprep.subr.mxu0 0.0
    %2071 = vmatpush2.msra.mxu0 %v1997
    %2072 = vmatprep.subr.mxu0 0.0
    %2073 = vmatpush2.msra.mxu0 %v1996
    %2074 = vmatprep.subr.mxu0 0.0
    %2075 = vmatpush2.msra.mxu0 %v1995
    %2076 = vmatprep.subr.mxu0 0.0
    %2077 = vmatpush2.msra.mxu0 %v1994
    %2078 = vmatprep.subr.mxu0 0.0
    %2079 = vmatpush2.msra.mxu0 %v1993
    %2080 = vmatprep.mubr.f32.mxu0 %v1976
    %2081 = vmatmul.mubr.f32.gmra.mxu0 %v1975
    %v2082 = vpop.f32.mrf.mxu0
    %v2083 = vadd.f32 %v2014, %v2082
    %v2084 = vpop.f32.mrf.mxu0
    %2085 = vdwg.mxu0
    %v2086 = vmax.f32 %v2083, 0.0
    %v2087 = vld [vmem:[#allocation9] sm:$0xff]
    %v2088 = vld [vmem:[#allocation9 + $0x8] sm:$0xff]
    %v2089 = vld [vmem:[#allocation9 + $0x10] sm:$0xff]
    %v2090 = vld [vmem:[#allocation9 + $0x18] sm:$0xff]
    %v2091 = vld [vmem:[#allocation9 + $0x20] sm:$0xff]
    %v2092 = vld [vmem:[#allocation9 + $0x28] sm:$0xff]
    %v2093 = vld [vmem:[#allocation9 + $0x30] sm:$0xff]
    %v2094 = vld [vmem:[#allocation9 + $0x38] sm:$0xff]
    %v2095 = vld [vmem:[#allocation9 + $0x40] sm:$0xff]
    %v2096 = vld [vmem:[#allocation9 + $0x48] sm:$0xff]
    %v2097 = vld [vmem:[#allocation9 + $0x50] sm:$0xff]
    %v2098 = vld [vmem:[#allocation9 + $0x58] sm:$0xff]
    %v2099 = vld [vmem:[#allocation9 + $0x60] sm:$0xff]
    %v2100 = vld [vmem:[#allocation9 + $0x68] sm:$0xff]
    %v2101 = vld [vmem:[#allocation9 + $0x70] sm:$0xff]
    %v2102 = vld [vmem:[#allocation9 + $0x78] sm:$0xff]
    %v2103 = vld [vmem:[%s13] sm:$0x1]
    %v2105 = vlaneseq
    %v2106 = vshrl.u32 %v2105, 7
    %v2107 = vsub.s32 0, %v2106
    %v2108 = vrot.slane %v2103, %v2107
    %2110 = vmatprep.subr.mxu0 0.0
    %2111 = vmatpush1.msra.mxu0 %v2102
    %2112 = vmatprep.subr.mxu0 0.0
    %2113 = vmatpush1.msra.mxu0 %v2101
    %2114 = vmatprep.subr.mxu0 0.0
    %2115 = vmatpush1.msra.mxu0 %v2100
    %2116 = vmatprep.subr.mxu0 0.0
    %2117 = vmatpush1.msra.mxu0 %v2099
    %2118 = vmatprep.subr.mxu0 0.0
    %2119 = vmatpush1.msra.mxu0 %v2098
    %2120 = vmatprep.subr.mxu0 0.0
    %2121 = vmatpush1.msra.mxu0 %v2097
    %2122 = vmatprep.subr.mxu0 0.0
    %2123 = vmatpush1.msra.mxu0 %v2096
    %2124 = vmatprep.subr.mxu0 0.0
    %2125 = vmatpush1.msra.mxu0 %v2095
    %2126 = vmatprep.subr.mxu0 0.0
    %2127 = vmatpush1.msra.mxu0 %v2094
    %2128 = vmatprep.subr.mxu0 0.0
    %2129 = vmatpush1.msra.mxu0 %v2093
    %2130 = vmatprep.subr.mxu0 0.0
    %2131 = vmatpush1.msra.mxu0 %v2092
    %2132 = vmatprep.subr.mxu0 0.0
    %2133 = vmatpush1.msra.mxu0 %v2091
    %2134 = vmatprep.subr.mxu0 0.0
    %2135 = vmatpush1.msra.mxu0 %v2090
    %2136 = vmatprep.subr.mxu0 0.0
    %2137 = vmatpush1.msra.mxu0 %v2089
    %2138 = vmatprep.subr.mxu0 0.0
    %2139 = vmatpush1.msra.mxu0 %v2088
    %2140 = vmatprep.subr.mxu0 0.0
    %2141 = vmatpush1.msra.mxu0 %v2087
    %2142 = vmatprep.subr.mxu0 0.0
    %2143 = vmatpush2.msra.mxu0 0.0
    %2144 = vmatprep.subr.mxu0 0.0
    %2145 = vmatpush2.msra.mxu0 0.0
    %2146 = vmatprep.subr.mxu0 0.0
    %2147 = vmatpush2.msra.mxu0 0.0
    %2148 = vmatprep.subr.mxu0 0.0
    %2149 = vmatpush2.msra.mxu0 0.0
    %2150 = vmatprep.subr.mxu0 0.0
    %2151 = vmatpush2.msra.mxu0 0.0
    %2152 = vmatprep.subr.mxu0 0.0
    %2153 = vmatpush2.msra.mxu0 0.0
    %2154 = vmatprep.subr.mxu0 0.0
    %2155 = vmatpush2.msra.mxu0 0.0
    %2156 = vmatprep.subr.mxu0 0.0
    %2157 = vmatpush2.msra.mxu0 0.0
    %2158 = vmatprep.subr.mxu0 0.0
    %2159 = vmatpush2.msra.mxu0 0.0
    %2160 = vmatprep.subr.mxu0 0.0
    %2161 = vmatpush2.msra.mxu0 0.0
    %2162 = vmatprep.subr.mxu0 0.0
    %2163 = vmatpush2.msra.mxu0 0.0
    %2164 = vmatprep.subr.mxu0 0.0
    %2165 = vmatpush2.msra.mxu0 0.0
    %2166 = vmatprep.subr.mxu0 0.0
    %2167 = vmatpush2.msra.mxu0 0.0
    %2168 = vmatprep.subr.mxu0 0.0
    %2169 = vmatpush2.msra.mxu0 0.0
    %2170 = vmatprep.subr.mxu0 0.0
    %2171 = vmatpush2.msra.mxu0 0.0
    %2172 = vmatprep.subr.mxu0 0.0
    %2173 = vmatpush2.msra.mxu0 0.0
    %2174 = vmatprep.mubr.f32.mxu0 0.0
    %2175 = vmatmul.mubr.f32.gmra.mxu0 %v2086
    %v2176 = vpop.f32.mrf.mxu0
    %v2177 = vadd.f32 %v2108, %v2176
    %v2178 = vpop.f32.mrf.mxu0
    %2179 = vdwg.mxu0
    %2180 = vst [vmem:[%s14] sm:$0xff] %v2177
    // Predicated region
    $region78: #{rnn_forward.1} parent=1 // pred_check
      _
    $region79: #{rnn_forward.1} parent=1 // pred_check_branch
      %2182 = sbr.rel (0) target = $region81
    $region80: #{rnn_forward.1} parent=1 // pred_region
      _
    $region81: #{rnn_forward.1} parent=1 // pred_fallthru
      _
    // Predicated region
    $region82: #{rnn_forward.1} parent=1 // pred_check
      _
    $region83: #{rnn_forward.1} parent=1 // pred_check_branch
      %2184 = sbr.rel (0) target = $region85
    $region84: #{rnn_forward.1} parent=1 // pred_region
      _
    $region85: #{rnn_forward.1} parent=1 // pred_fallthru
      _
    %2185 = vsyncpa [#allocation3], 1
    %2186 = vsyncpa [#allocation5], 1
    %2187 = vsyncpa [#allocation8], 1

</llo_original>
